<compile_context>
chip_gen: v5e
topology: v5e:2x2
jax: 0.10.0
libtpu: 0.0.40
codegen_flags: <defaults>
</compile_context>

<pallas_src>
import functools
import math

import jax
import jax.numpy as jnp
from jax import lax
from jax.experimental import pallas as pl
from jax.experimental.pallas import tpu as pltpu

_GROUP = 128            # joints packed per row (lane-dense)
_WIDTH = 9 * _GROUP     # 1152 f32 lanes per packed row

# Minimax polynomial for acos on [0, 1] (|abs err| < 2e-8).  Inverse trig is
# not a guaranteed Mosaic lowering; abs/mul/add/sqrt/where are.
_ACOS_COEFFS = (
    1.5707963050, -0.2145988016, 0.0889789874, -0.0501743046,
    0.0308918810, -0.0170881256, 0.0066700901, -0.0012624911,
)


def _acos_f32(x):
    """Elementwise arccos for |x| <= 1 using sqrt + Horner polynomial."""
    a = jnp.abs(x)
    p = jnp.float32(_ACOS_COEFFS[-1])
    for c in reversed(_ACOS_COEFFS[:-1]):
        p = p * a + jnp.float32(c)
    r = p * jnp.sqrt(jnp.maximum(1.0 - a, 0.0))
    return jnp.where(x < 0, jnp.float32(math.pi) - r, r)


def _vmem_capacity_bytes():
    """Per-TensorCore VMEM capacity; conservative fallback if unavailable."""
    try:
        cap = int(pltpu.get_tpu_info().vmem_capacity_bytes)
        if cap > 0:
            return cap
    except Exception:
        pass
    return 64 * 1024 * 1024   # v7x per-TC value (smallest of v5e/v6e/v7x)


def _rotation_loss_kernel(rhat_ref, rgt_ref, out_ref, sel_ref, acc_ref=None, *,
                          n_valid, tile_rows, steps_per_slice, reduce_out):
    p = pl.program_id(0)                    # parallel slice (megacore on v7x)
    s = pl.program_id(1)                    # sequential step within the slice
    block_row = p * steps_per_slice + s     # logical (unclamped) block index

    @pl.when(s == 0)
    def _init():
        # sel[l, j] = 1 iff lane l holds one of joint j's nine matrix entries
        # (lanes 9j .. 9j+8).  0/1 is exact in bf16.  Built once per slice.
        l_idx = lax.broadcasted_iota(jnp.int32, (_WIDTH, _GROUP), 0)
        j_idx = lax.broadcasted_iota(jnp.int32, (_WIDTH, _GROUP), 1)
        d = l_idx - 9 * j_idx
        sel_ref[...] = jnp.where((d >= 0) & (d < 9), 1.0, 0.0).astype(jnp.bfloat16)
        if reduce_out:
            acc_ref[...] = jnp.zeros((tile_rows, _GROUP), jnp.float32)

    # Elementwise product of the two rotation slabs (VPU).
    prod = rhat_ref[...] * rgt_ref[...]                       # (tile, 1152) f32
    # Per-joint trace = group-of-9 lane sums on the MXU.  Precision is pinned
    # explicitly: hi/lo bf16 split -> two single-pass bf16 matmuls with f32
    # accumulation (~1e-5 absolute trace error, no multi-pass f32 matmul).
    hi = prod.astype(jnp.bfloat16)
    lo = (prod - hi.astype(jnp.float32)).astype(jnp.bfloat16)
    sel = sel_ref[...]
    trace = (jnp.dot(hi, sel, preferred_element_type=jnp.float32)
             + jnp.dot(lo, sel, preferred_element_type=jnp.float32))
    cos = jnp.clip((trace - 1.0) * 0.5, -1.0 + 1e-6, 1.0 - 1e-6)
    ang = _acos_f32(cos)                                      # (tile, 128) f32

    if reduce_out:
        # Mask arithmetic only on blocks that can contain invalid joints (the
        # tail of the last real block and phantom overflow steps); every other
        # step accumulates unmasked.
        block_end = (block_row + 1) * tile_rows * _GROUP

        @pl.when(block_end <= n_valid)
        def _accumulate_full():
            acc_ref[...] += ang

        @pl.when(block_end > n_valid)
        def _accumulate_masked():
            r_idx = lax.broadcasted_iota(jnp.int32, (tile_rows, _GROUP), 0)
            c_idx = lax.broadcasted_iota(jnp.int32, (tile_rows, _GROUP), 1)
            joint = (block_row * tile_rows + r_idx) * _GROUP + c_idx
            acc_ref[...] += jnp.where(joint < n_valid, ang, 0.0)

        @pl.when(s == steps_per_slice - 1)
        def _finalize():
            total = jnp.sum(acc_ref[...])          # single epilogue reduce
            rr = lax.broadcasted_iota(jnp.int32, (8, 128), 0)
            cc = lax.broadcasted_iota(jnp.int32, (8, 128), 1)
            out_ref[...] = jnp.where((rr == 0) & (cc == 0), total, 0.0)
    else:
        # Padded / out-of-range joints are sliced off in the wrapper; a
        # phantom overflow step rewrites an already-written block of its own
        # slice with identical values (clamped index_map), which is harmless.
        out_ref[...] = ang


def rotation_loss(R_hat, R_gt, reduction='mean', *, _max_tile_rows=None):
    """Geodesic rotation loss.  R_hat, R_gt: (B, J, 3, 3) float32."""
    assert R_hat.shape == R_gt.shape and R_hat.shape[-2:] == (3, 3)
    B, J = R_hat.shape[0], R_hat.shape[1]
    N = B * J
    rows = pl.cdiv(N, _GROUP)
    n_pad = rows * _GROUP

    def to_rows(R):
        flat = R.reshape(N, 9).astype(jnp.float32)    # free, contiguous view
        if n_pad != N:
            # TODO(synk): padding to a multiple of 128 joints costs one extra
            # HBM pass over the inputs; the common large-N case (N % 128 == 0)
            # is zero-copy.  Producers that care should batch accordingly.
            flat = jnp.pad(flat, ((0, n_pad - N), (0, 0)))
        return flat.reshape(rows, _WIDTH)             # free, contiguous view

    rhat = to_rows(R_hat)
    rgt = to_rows(R_gt)
    reduce_out = reduction in ('mean', 'sum')

    # ---- per-generation VMEM budget & tile sizing --------------------------
    # Full per-step working set (bytes per tile row unless noted):
    #   inputs (2 arrays x 2 pipeline buffers) .... 4 * 1152 * 4
    #   prod f32 + hi-upcast temporary ............ 2 * 1152 * 4
    #   hi / lo bf16 temporaries .................. 2 * 1152 * 2
    #   per-joint temporaries (~6) ................ 6 * 128 * 4
    #   accumulator ('mean'/'sum') or 2 output buffers ('none')
    #   fixed: bf16 selection matrix (288 KiB) + reduce output + slack.
    cap = _vmem_capacity_bytes()              # 128 MiB v5e/v6e, 64 MiB/TC v7x
    budget = min(24 << 20, cap // 3)
    per_row = (4 * _WIDTH * 4 + 2 * _WIDTH * 4 + 2 * _WIDTH * 2
               + 6 * _GROUP * 4)
    per_row += (_GROUP * 4) if reduce_out else (2 * _GROUP * 4)
    fixed = _WIDTH * _GROUP * 2 + 2 * 8 * 128 * 4 + (512 << 10)
    tile_rows = max(8, ((budget - fixed) // per_row) // 8 * 8)
    if rows >= 16:
        # Guarantee at least two blocks so both v7x TensorCores get work.
        tile_rows = min(tile_rows, pl.cdiv(pl.cdiv(rows, 2), 8) * 8)
    if _max_tile_rows is not None:             # testing hook
        tile_rows = max(8, min(tile_rows, (_max_tile_rows // 8) * 8))
    if tile_rows >= rows:
        tile_rows = rows                       # single full-extent block

    n_blocks = pl.cdiv(rows, tile_rows)
    n_slices = 2 if n_blocks >= 2 else 1
    steps = pl.cdiv(n_blocks, n_slices)        # last step of slice 1 may overflow
    last_block = n_blocks - 1

    def row_index(p, s):                       # clamp phantom overflow steps
        return (jnp.minimum(p * steps + s, last_block), 0)

    in_spec = pl.BlockSpec((tile_rows, _WIDTH), row_index)
    scratch = [pltpu.VMEM((_WIDTH, _GROUP), jnp.bfloat16)]     # sel matrix
    if reduce_out:
        out_shape = jax.ShapeDtypeStruct((8 * n_slices, 128), jnp.float32)
        out_spec = pl.BlockSpec((8, 128), lambda p, s: (p, 0))
        scratch.append(pltpu.VMEM((tile_rows, _GROUP), jnp.float32))
    else:
        out_shape = jax.ShapeDtypeStruct((rows, _GROUP), jnp.float32)
        out_spec = pl.BlockSpec((tile_rows, _GROUP), row_index)

    kernel = functools.partial(
        _rotation_loss_kernel, n_valid=N, tile_rows=tile_rows,
        steps_per_slice=steps, reduce_out=reduce_out)

    # Scoped-VMEM limit sized to the real working set (+ headroom), well under
    # physical capacity on every generation.
    vmem_limit = int(max(24 << 20, min(budget + (8 << 20), cap // 2)))

    out = pl.pallas_call(
        kernel,
        out_shape=out_shape,
        grid_spec=pltpu.PrefetchScalarGridSpec(
            num_scalar_prefetch=0,
            grid=(n_slices, steps),
            in_specs=[in_spec, in_spec],
            out_specs=out_spec,
            scratch_shapes=scratch,
        ),
        compiler_params=pltpu.CompilerParams(
            dimension_semantics=("parallel", "arbitrary"),
            vmem_limit_bytes=vmem_limit),
    )(rhat, rgt)

    if reduction == 'none':
        return out.reshape(-1)[:N].reshape(B, J)
    total = jnp.sum(out)                       # sum of per-slice partials (tiny)
    if reduction == 'mean':
        total = total / jnp.float32(N)         # joint count is static
    return total


# ---------------------------------------------------------------------------
# Pure-JAX reference (mirrors the PyTorch forward) + deterministic inputs.
# ---------------------------------------------------------------------------
def rotation_loss_ref(R_hat, R_gt, reduction='mean'):
    R_rel = jnp.matmul(R_hat, jnp.swapaxes(R_gt, -1, -2))
    trace = jnp.trace(R_rel, axis1=-2, axis2=-1)
    c = jnp.clip((trace - 1.0) / 2.0, -1.0 + 1e-6, 1.0 - 1e-6)
    ang = jnp.arccos(c)
    if reduction == 'mean':
        return ang.mean()
    if reduction == 'sum':
        return ang.sum()
    return ang


def random_rotations(key, b, j):
    """Random valid rotation matrices via Rodrigues' formula."""
    k1, k2 = jax.random.split(key)
    axis = jax.random.normal(k1, (b, j, 3), dtype=jnp.float32)
    axis = axis / jnp.linalg.norm(axis, axis=-1, keepdims=True)
    theta = jax.random.uniform(k2, (b, j), minval=0.0, maxval=math.pi,
                               dtype=jnp.float32)
    x, y, z = axis[..., 0], axis[..., 1], axis[..., 2]
    zero = jnp.zeros_like(x)
    K = jnp.stack([jnp.stack([zero, -z, y], -1),
                   jnp.stack([z, zero, -x], -1),
                   jnp.stack([-y, x, zero], -1)], -2)          # (b, j, 3, 3)
    s = jnp.sin(theta)[..., None, None]
    c = jnp.cos(theta)[..., None, None]
    return jnp.eye(3, dtype=jnp.float32) + s * K + (1.0 - c) * (K @ K)


def _check(out, ref, tag):
    out = jax.block_until_ready(out)
    assert out.shape == ref.shape, (tag, out.shape, ref.shape)
    assert bool(jnp.allclose(out, ref, atol=1e-3, rtol=1e-3)), tag


if __name__ == "__main__":
    key = jax.random.PRNGKey(0)
    k1, k2, k3, k4, k5, k6 = jax.random.split(key, 6)

    # Case 1: module-sized input (B=2, J=8); padded single-block path.
    R_hat = random_rotations(k1, 2, 8)
    R_gt = random_rotations(k2, 2, 8)
    for red in ('mean', 'sum', 'none'):
        _check(rotation_loss(R_hat, R_gt, red),
               rotation_loss_ref(R_hat, R_gt, red), f'case1-{red}')

    # Case 2: N = 21 (odd joint count) exercises padding + tail mask.
    R_hat2 = random_rotations(k3, 3, 7)
    R_gt2 = random_rotations(k4, 3, 7)
    for red in ('mean', 'none'):
        _check(rotation_loss(R_hat2, R_gt2, red),
               rotation_loss_ref(R_hat2, R_gt2, red), f'case2-{red}')

    # Case 3: zero-copy path (N % 128 == 0) with an ODD block count
    # (rows=17, tile=8): guaranteed 2-way split + masked phantom overflow step.
    R_hat3 = random_rotations(k5, 17, 128)
    R_gt3 = random_rotations(k6, 17, 128)
    for red in ('mean', 'sum', 'none'):
        _check(rotation_loss(R_hat3, R_gt3, red, _max_tile_rows=8),
               rotation_loss_ref(R_hat3, R_gt3, red), f'case3-{red}')

    # Case 4: even block count, balanced 2-way split.
    R_hat4 = random_rotations(k5, 16, 128)
    R_gt4 = random_rotations(k6, 16, 128)
    _check(rotation_loss(R_hat4, R_gt4, 'mean', _max_tile_rows=8),
           rotation_loss_ref(R_hat4, R_gt4, 'mean'), 'case4-mean')

    print("KERNEL_OK")
</pallas_src>

<mosaic_0001>
module attributes {stable_mosaic.version = 11 : i64} {
  func.func @_rotation_loss_kernel(%arg0: i32, %arg1: i32, %arg2: memref<1x1152xf32, #tpu.memory_space<vmem>>, %arg3: memref<1x1152xf32, #tpu.memory_space<vmem>>, %arg4: memref<8x128xf32, #tpu.memory_space<vmem>>, %arg5: memref<1152x128xbf16, #tpu.memory_space<vmem>>, %arg6: memref<1x128xf32, #tpu.memory_space<vmem>>) attributes {dimension_semantics = [#tpu.dimension_semantics<parallel>, #tpu.dimension_semantics<arbitrary>], iteration_bounds = array<i64: 1, 1>, scalar_prefetch = 0 : i64, scratch_operands = 2 : i64, tpu.core_type = #tpu.core_type<tc>, window_params = [{transform_indices = @transform_0, window_bounds = array<i64: 1, 1152>}, {transform_indices = @transform_1, window_bounds = array<i64: 1, 1152>}, {transform_indices = @transform_2, window_bounds = array<i64: 8, 128>}]} {
    %c1_i32 = arith.constant 1 : i32
    %0 = arith.muli %arg0, %c1_i32 : i32
    %1 = arith.addi %0, %arg1 : i32
    %c0_i32 = arith.constant 0 : i32
    %2 = arith.cmpi eq, %arg1, %c0_i32 : i32
    %3 = arith.extui %2 : i1 to i32
    %c0_i32_0 = arith.constant 0 : i32
    %4 = arith.cmpi ne, %3, %c0_i32_0 : i32
    scf.if %4 {
      %70 = tpu.iota {dimensions = array<i32: 0>} : vector<1152x128xi32>
      %71 = tpu.iota {dimensions = array<i32: 1>} : vector<1152x128xi32>
      %c9_i32 = arith.constant 9 : i32
      %72 = vector.broadcast %c9_i32 : i32 to vector<1152x128xi32>
      %73 = arith.muli %72, %71 : vector<1152x128xi32>
      %74 = arith.subi %70, %73 : vector<1152x128xi32>
      %c0_i32_30 = arith.constant 0 : i32
      %75 = vector.broadcast %c0_i32_30 : i32 to vector<1152x128xi32>
      %76 = arith.cmpi sge, %74, %75 : vector<1152x128xi32>
      %c9_i32_31 = arith.constant 9 : i32
      %77 = vector.broadcast %c9_i32_31 : i32 to vector<1152x128xi32>
      %78 = arith.cmpi slt, %74, %77 : vector<1152x128xi32>
      %79 = arith.andi %76, %78 : vector<1152x128xi1>
      %cst_32 = arith.constant 1.000000e+00 : f32
      %cst_33 = arith.constant 0.000000e+00 : f32
      %80 = vector.broadcast %cst_32 : f32 to vector<1152x128xf32>
      %81 = vector.broadcast %cst_33 : f32 to vector<1152x128xf32>
      %82 = arith.select %79, %80, %81 : vector<1152x128xi1>, vector<1152x128xf32>
      %83 = arith.truncf %82 : vector<1152x128xf32> to vector<1152x128xbf16>
      %c0_34 = arith.constant 0 : index
      %c0_35 = arith.constant 0 : index
      %84 = vector.load %arg5[%c0_34, %c0_35] : memref<1152x128xbf16, #tpu.memory_space<vmem>>, vector<1152x128xbf16>
      tpu.vector_store %arg5[%c0_34, %c0_35], %83 {strides = array<i32>} : memref<1152x128xbf16, #tpu.memory_space<vmem>>, vector<1152x128xbf16>,
      %cst_36 = arith.constant 0.000000e+00 : f32
      %85 = vector.broadcast %cst_36 : f32 to vector<1x128xf32>
      %c0_37 = arith.constant 0 : index
      %c0_38 = arith.constant 0 : index
      %86 = vector.load %arg6[%c0_37, %c0_38] : memref<1x128xf32, #tpu.memory_space<vmem>>, vector<1x128xf32>
      tpu.vector_store %arg6[%c0_37, %c0_38], %85 {strides = array<i32>} : memref<1x128xf32, #tpu.memory_space<vmem>>, vector<1x128xf32>,
    } else {
    }
    %c0 = arith.constant 0 : index
    %c0_1 = arith.constant 0 : index
    %5 = vector.load %arg2[%c0, %c0_1] : memref<1x1152xf32, #tpu.memory_space<vmem>>, vector<1x1152xf32>
    %c0_2 = arith.constant 0 : index
    %c0_3 = arith.constant 0 : index
    %6 = vector.load %arg3[%c0_2, %c0_3] : memref<1x1152xf32, #tpu.memory_space<vmem>>, vector<1x1152xf32>
    %7 = arith.mulf %5, %6 : vector<1x1152xf32>
    %8 = arith.truncf %7 : vector<1x1152xf32> to vector<1x1152xbf16>
    %9 = arith.extf %8 : vector<1x1152xbf16> to vector<1x1152xf32>
    %10 = arith.subf %7, %9 : vector<1x1152xf32>
    %11 = arith.truncf %10 : vector<1x1152xf32> to vector<1x1152xbf16>
    %c0_4 = arith.constant 0 : index
    %c0_5 = arith.constant 0 : index
    %12 = vector.load %arg5[%c0_4, %c0_5] : memref<1152x128xbf16, #tpu.memory_space<vmem>>, vector<1152x128xbf16>
    %cst = arith.constant dense<0.000000e+00> : vector<1x128xf32>
    %13 = tpu.matmul %8, %12, %cst {dimension_numbers = #tpu.dot_dimension_numbers<[1], [0], [0], [1], [0, 0, 1, 1], [], []>} : vector<1x1152xbf16>, vector<1152x128xbf16>, vector<1x128xf32> -> vector<1x128xf32>
    %cst_6 = arith.constant dense<0.000000e+00> : vector<1x128xf32>
    %14 = tpu.matmul %11, %12, %cst_6 {dimension_numbers = #tpu.dot_dimension_numbers<[1], [0], [0], [1], [0, 0, 1, 1], [], []>} : vector<1x1152xbf16>, vector<1152x128xbf16>, vector<1x128xf32> -> vector<1x128xf32>
    %15 = arith.addf %13, %14 : vector<1x128xf32>
    %cst_7 = arith.constant 1.000000e+00 : f32
    %16 = vector.broadcast %cst_7 : f32 to vector<1x128xf32>
    %17 = arith.subf %15, %16 : vector<1x128xf32>
    %cst_8 = arith.constant 5.000000e-01 : f32
    %18 = vector.broadcast %cst_8 : f32 to vector<1x128xf32>
    %19 = arith.mulf %17, %18 : vector<1x128xf32>
    %cst_9 = arith.constant -0.999998986 : f32
    %cst_10 = arith.constant 0.999998986 : f32
    %20 = vector.broadcast %cst_9 : f32 to vector<1x128xf32>
    %21 = arith.maximumf %20, %19 : vector<1x128xf32>
    %22 = vector.broadcast %cst_10 : f32 to vector<1x128xf32>
    %23 = arith.minimumf %22, %21 : vector<1x128xf32>
    %24 = math.absf %23 : vector<1x128xf32>
    %cst_11 = arith.constant -0.0012624911 : f32
    %25 = vector.broadcast %cst_11 : f32 to vector<1x128xf32>
    %26 = arith.mulf %25, %24 : vector<1x128xf32>
    %cst_12 = arith.constant 6.670090e-03 : f32
    %27 = vector.broadcast %cst_12 : f32 to vector<1x128xf32>
    %28 = arith.addf %26, %27 : vector<1x128xf32>
    %29 = arith.mulf %28, %24 : vector<1x128xf32>
    %cst_13 = arith.constant -0.0170881264 : f32
    %30 = vector.broadcast %cst_13 : f32 to vector<1x128xf32>
    %31 = arith.addf %29, %30 : vector<1x128xf32>
    %32 = arith.mulf %31, %24 : vector<1x128xf32>
    %cst_14 = arith.constant 0.0308918804 : f32
    %33 = vector.broadcast %cst_14 : f32 to vector<1x128xf32>
    %34 = arith.addf %32, %33 : vector<1x128xf32>
    %35 = arith.mulf %34, %24 : vector<1x128xf32>
    %cst_15 = arith.constant -0.0501743034 : f32
    %36 = vector.broadcast %cst_15 : f32 to vector<1x128xf32>
    %37 = arith.addf %35, %36 : vector<1x128xf32>
    %38 = arith.mulf %37, %24 : vector<1x128xf32>
    %cst_16 = arith.constant 0.0889789909 : f32
    %39 = vector.broadcast %cst_16 : f32 to vector<1x128xf32>
    %40 = arith.addf %38, %39 : vector<1x128xf32>
    %41 = arith.mulf %40, %24 : vector<1x128xf32>
    %cst_17 = arith.constant -0.214598805 : f32
    %42 = vector.broadcast %cst_17 : f32 to vector<1x128xf32>
    %43 = arith.addf %41, %42 : vector<1x128xf32>
    %44 = arith.mulf %43, %24 : vector<1x128xf32>
    %cst_18 = arith.constant 1.57079625 : f32
    %45 = vector.broadcast %cst_18 : f32 to vector<1x128xf32>
    %46 = arith.addf %44, %45 : vector<1x128xf32>
    %cst_19 = arith.constant 1.000000e+00 : f32
    %47 = vector.broadcast %cst_19 : f32 to vector<1x128xf32>
    %48 = arith.subf %47, %24 : vector<1x128xf32>
    %cst_20 = arith.constant 0.000000e+00 : f32
    %49 = vector.broadcast %cst_20 : f32 to vector<1x128xf32>
    %50 = arith.maximumf %48, %49 : vector<1x128xf32>
    %51 = math.sqrt %50 : vector<1x128xf32>
    %52 = arith.mulf %46, %51 : vector<1x128xf32>
    %cst_21 = arith.constant 0.000000e+00 : f32
    %53 = vector.broadcast %cst_21 : f32 to vector<1x128xf32>
    %54 = arith.cmpf olt, %23, %53 : vector<1x128xf32>
    %cst_22 = arith.constant 3.14159274 : f32
    %55 = vector.broadcast %cst_22 : f32 to vector<1x128xf32>
    %56 = arith.subf %55, %52 : vector<1x128xf32>
    %57 = arith.select %54, %56, %52 : vector<1x128xi1>, vector<1x128xf32>
    %c1_i32_23 = arith.constant 1 : i32
    %58 = arith.addi %1, %c1_i32_23 : i32
    %c1_i32_24 = arith.constant 1 : i32
    %59 = arith.muli %58, %c1_i32_24 : i32
    %c128_i32 = arith.constant 128 : i32
    %60 = arith.muli %59, %c128_i32 : i32
    %c16_i32 = arith.constant 16 : i32
    %61 = arith.cmpi sle, %60, %c16_i32 : i32
    %62 = arith.extui %61 : i1 to i32
    %c0_i32_25 = arith.constant 0 : i32
    %63 = arith.cmpi ne, %62, %c0_i32_25 : i32
    scf.if %63 {
      %c0_30 = arith.constant 0 : index
      %c0_31 = arith.constant 0 : index
      %70 = vector.load %arg6[%c0_30, %c0_31] : memref<1x128xf32, #tpu.memory_space<vmem>>, vector<1x128xf32>
      %71 = arith.addf %70, %57 : vector<1x128xf32>
      %c0_32 = arith.constant 0 : index
      %c0_33 = arith.constant 0 : index
      %72 = vector.load %arg6[%c0_32, %c0_33] : memref<1x128xf32, #tpu.memory_space<vmem>>, vector<1x128xf32>
      tpu.vector_store %arg6[%c0_32, %c0_33], %71 {strides = array<i32>} : memref<1x128xf32, #tpu.memory_space<vmem>>, vector<1x128xf32>,
    } else {
    }
    %c16_i32_26 = arith.constant 16 : i32
    %64 = arith.cmpi sgt, %60, %c16_i32_26 : i32
    %65 = arith.extui %64 : i1 to i32
    %c0_i32_27 = arith.constant 0 : i32
    %66 = arith.cmpi ne, %65, %c0_i32_27 : i32
    scf.if %66 {
      %70 = tpu.iota {dimensions = array<i32: 0>} : vector<1x128xi32>
      %71 = tpu.iota {dimensions = array<i32: 1>} : vector<1x128xi32>
      %c1_i32_30 = arith.constant 1 : i32
      %72 = arith.muli %1, %c1_i32_30 : i32
      %73 = vector.broadcast %72 : i32 to vector<1x128xi32>
      %74 = arith.addi %73, %70 : vector<1x128xi32>
      %c128_i32_31 = arith.constant 128 : i32
      %75 = vector.broadcast %c128_i32_31 : i32 to vector<1x128xi32>
      %76 = arith.muli %74, %75 : vector<1x128xi32>
      %77 = arith.addi %76, %71 : vector<1x128xi32>
      %c0_32 = arith.constant 0 : index
      %c0_33 = arith.constant 0 : index
      %78 = vector.load %arg6[%c0_32, %c0_33] : memref<1x128xf32, #tpu.memory_space<vmem>>, vector<1x128xf32>
      %c16_i32_34 = arith.constant 16 : i32
      %79 = vector.broadcast %c16_i32_34 : i32 to vector<1x128xi32>
      %80 = arith.cmpi slt, %77, %79 : vector<1x128xi32>
      %cst_35 = arith.constant 0.000000e+00 : f32
      %81 = vector.broadcast %cst_35 : f32 to vector<1x128xf32>
      %82 = arith.select %80, %57, %81 : vector<1x128xi1>, vector<1x128xf32>
      %83 = arith.addf %78, %82 : vector<1x128xf32>
      %c0_36 = arith.constant 0 : index
      %c0_37 = arith.constant 0 : index
      %84 = vector.load %arg6[%c0_36, %c0_37] : memref<1x128xf32, #tpu.memory_space<vmem>>, vector<1x128xf32>
      tpu.vector_store %arg6[%c0_36, %c0_37], %83 {strides = array<i32>} : memref<1x128xf32, #tpu.memory_space<vmem>>, vector<1x128xf32>,
    } else {
    }
    %c0_i32_28 = arith.constant 0 : i32
    %67 = arith.cmpi eq, %arg1, %c0_i32_28 : i32
    %68 = arith.extui %67 : i1 to i32
    %c0_i32_29 = arith.constant 0 : i32
    %69 = arith.cmpi ne, %68, %c0_i32_29 : i32
    scf.if %69 {
      %c0_30 = arith.constant 0 : index
      %c0_31 = arith.constant 0 : index
      %70 = vector.load %arg6[%c0_30, %c0_31] : memref<1x128xf32, #tpu.memory_space<vmem>>, vector<1x128xf32>
      %71 = vector.shape_cast %70 : vector<1x128xf32> to vector<1x1x128xf32>
      %cst_32 = arith.constant dense<0.000000e+00> : vector<1xf32>
      %72 = vector.multi_reduction <add>, %71, %cst_32 [1, 2] : vector<1x1x128xf32> to vector<1xf32>
      %73 = vector.shape_cast %72 : vector<1xf32> to vector<1x1x1xf32>
      %74 = vector.extract %73[0, 0, 0] : f32 from vector<1x1x1xf32>
      %75 = tpu.iota {dimensions = array<i32: 0>} : vector<8x128xi32>
      %76 = tpu.iota {dimensions = array<i32: 1>} : vector<8x128xi32>
      %c0_i32_33 = arith.constant 0 : i32
      %77 = vector.broadcast %c0_i32_33 : i32 to vector<8x128xi32>
      %78 = arith.cmpi eq, %75, %77 : vector<8x128xi32>
      %c0_i32_34 = arith.constant 0 : i32
      %79 = vector.broadcast %c0_i32_34 : i32 to vector<8x128xi32>
      %80 = arith.cmpi eq, %76, %79 : vector<8x128xi32>
      %81 = arith.andi %78, %80 : vector<8x128xi1>
      %cst_35 = arith.constant 0.000000e+00 : f32
      %82 = vector.broadcast %74 : f32 to vector<8x128xf32>
      %83 = vector.broadcast %cst_35 : f32 to vector<8x128xf32>
      %84 = arith.select %81, %82, %83 : vector<8x128xi1>, vector<8x128xf32>
      %c0_36 = arith.constant 0 : index
      %c0_37 = arith.constant 0 : index
      %85 = vector.load %arg4[%c0_36, %c0_37] : memref<8x128xf32, #tpu.memory_space<vmem>>, vector<8x128xf32>
      tpu.vector_store %arg4[%c0_36, %c0_37], %84 {strides = array<i32>} : memref<8x128xf32, #tpu.memory_space<vmem>>, vector<8x128xf32>,
    } else {
    }
    return
  }
  func.func @transform_0(%arg0: i32, %arg1: i32) -> (i32, i32) {
    %c1_i32 = arith.constant 1 : i32
    %0 = arith.muli %arg0, %c1_i32 : i32
    %1 = arith.addi %0, %arg1 : i32
    %c0_i32 = arith.constant 0 : i32
    %2 = arith.minsi %1, %c0_i32 : i32
    %c0_i32_0 = arith.constant 0 : i32
    %c0_i32_1 = arith.constant 0 : i32
    return %2, %c0_i32_0 : i32, i32
  }
  func.func @transform_1(%arg0: i32, %arg1: i32) -> (i32, i32) {
    %c1_i32 = arith.constant 1 : i32
    %0 = arith.muli %arg0, %c1_i32 : i32
    %1 = arith.addi %0, %arg1 : i32
    %c0_i32 = arith.constant 0 : i32
    %2 = arith.minsi %1, %c0_i32 : i32
    %c0_i32_0 = arith.constant 0 : i32
    %c0_i32_1 = arith.constant 0 : i32
    return %2, %c0_i32_0 : i32, i32
  }
  func.func @transform_2(%arg0: i32, %arg1: i32) -> (i32, i32) {
    %c0_i32 = arith.constant 0 : i32
    %c0_i32_0 = arith.constant 0 : i32
    return %arg0, %c0_i32 : i32, i32
  }
}

</mosaic_0001>

<llo_original>
// kernel: tpu_custom_call.1
$region0: #{tpu_custom_call.1}
  #allocation0 [shape = 'u32[]', space=smem, size = 0x4, offset = 0x4, fixed_abs, tag = 'smem constant byte address 0x4 - core index']
  #allocation1 [shape = 'u32[72,128]{1,0:T(1,128)}', space=vmem, size = 0x9000, scoped, tag = 'internal scratch']
  #allocation2 [shape = 'bf16[1152,128]{1,0:T(8,128)(2,1)}', space=vmem, size = 0x48000, scoped, tag = 'scratch operand']
  #allocation3 [shape = 'f32[1,128]{1,0:T(1,128)}', space=vmem, size = 0x200, scoped, tag = 'scratch operand']
  %s0 = inlined_call_operand.hbm [shape: f32[1,1152], index: 0, kind: input, shape index: {}]
  %s1 = inlined_call_operand.hbm [shape: f32[1,1152], index: 1, kind: input, shape index: {}]
  %s2 = inlined_call_operand.hbm [shape: f32[8,128], index: 2, kind: output, shape index: {}]
  %s3 = sld [smem:[#allocation0]]
  $region42: #{tpu_custom_call.1} parent=0
    _
  %s5 = ssub.s32 1, %s3
  %s6 = scalar_select 0, %s5, %s3
  $region1: #{tpu_custom_call.1} parent=0
    #allocation4 [shape = 'u8[4608]{0}', space=vmem, size = 0x1400, scoped, tag = 'input window, operand 0, single buffered']
    #allocation5 [shape = 's32[1]{0}', space=sflag, size = 0x4, scoped, tag = 'scoped memory for tpu_custom_call.1']
    #allocation6 [shape = 's32[1]{0}', space=sflag, size = 0x4, scoped, tag = 'scoped memory for tpu_custom_call.1']
    #allocation7 [shape = 'u8[4608]{0}', space=vmem, size = 0x1400, scoped, tag = 'input window, operand 1, single buffered']
    #allocation8 [shape = 's32[1]{0}', space=sflag, size = 0x4, scoped, tag = 'scoped memory for tpu_custom_call.1']
    #allocation9 [shape = 'u8[4096]{0}', space=vmem, size = 0x1000, scoped, tag = 'output window, operand 0, single buffered']
    %7 = vsyncpa [#allocation5], 0
    %8 = vsyncpa [#allocation8], 0
    %9 = vsyncpa [#allocation6], 0
    // Predicated region
    $region2: #{tpu_custom_call.1} parent=1 // pred_check
      _
    $region3: #{tpu_custom_call.1} parent=1 // pred_check_branch
      %11 = sbr.rel (0) target = $region5
    $region4: #{tpu_custom_call.1} parent=1 // pred_region
      %s12 = sadd.s32 0, 0
      %p13 = scmp.lt.s32.totalorder %s12, 0
      %s14 = scalar_select %p13, %s12, 0
      %16 = vsyncadd [#allocation5], 0
      %s17 = smul.addr %s14, 9
      %s18 = scalar_lea.hbm %s0, %s17
      %s20 = sshll.u32 %s18, 4
      %s21 = int_to_ptr.hbm [resolvable:$true] %s20
      %s22 = sshll.u32 [#allocation4], 4
      %s23 = int_to_ptr.vmem [resolvable:$true] %s22
      %25 = dma.hbm_to_vmem [thread:$0]  %s21, 144, %s23, [#allocation5]
    $region5: #{tpu_custom_call.1} parent=1 // pred_fallthru
      _
    // Predicated region
    $region6: #{tpu_custom_call.1} parent=1 // pred_check
      _
    $region7: #{tpu_custom_call.1} parent=1 // pred_check_branch
      %27 = sbr.rel (0) target = $region9
    $region8: #{tpu_custom_call.1} parent=1 // pred_region
      %s28 = sadd.s32 0, 0
      %p29 = scmp.lt.s32.totalorder %s28, 0
      %s30 = scalar_select %p29, %s28, 0
      %32 = vsyncadd [#allocation8], 0
      %s33 = smul.addr %s30, 9
      %s34 = scalar_lea.hbm %s1, %s33
      %s36 = sshll.u32 %s34, 4
      %s37 = int_to_ptr.hbm [resolvable:$true] %s36
      %s38 = sshll.u32 [#allocation7], 4
      %s39 = int_to_ptr.vmem [resolvable:$true] %s38
      %41 = dma.hbm_to_vmem [thread:$0]  %s37, 144, %s39, [#allocation8]
    $region9: #{tpu_custom_call.1} parent=1 // pred_fallthru
      _
    // Predicated region
    $region10: #{tpu_custom_call.1} parent=1 // pred_check
      _
    $region11: #{tpu_custom_call.1} parent=1 // pred_check_branch
      %43 = sbr.rel (0) target = $region13
    $region12: #{tpu_custom_call.1} parent=1 // pred_region
      %45 = dma.done [#allocation5], 144
    $region13: #{tpu_custom_call.1} parent=1 // pred_fallthru
      _
    // Predicated region
    $region14: #{tpu_custom_call.1} parent=1 // pred_check
      _
    $region15: #{tpu_custom_call.1} parent=1 // pred_check_branch
      %47 = sbr.rel (0) target = $region17
    $region16: #{tpu_custom_call.1} parent=1 // pred_region
      %49 = dma.done [#allocation8], 144
    $region17: #{tpu_custom_call.1} parent=1 // pred_fallthru
      _
    %s50 = sadd.s32 0, 0
    %p51 = scmp.lt.s32.totalorder %s50, 0
    %s52 = scalar_select %p51, %s50, 0
    %s53 = sadd.s32 0, 0
    %p54 = scmp.lt.s32.totalorder %s53, 0
    %s55 = scalar_select %p54, %s53, 0
    %s56 = sadd.s32 0, 0
    %p57 = scmp.eq.s32.totalorder 0, 0
    // Predicated region
    $region18: #{tpu_custom_call.1} parent=1 // pred_check
      %p58 = pneg %p57
    $region19: #{tpu_custom_call.1} parent=1 // pred_check_branch
      %60 = sbr.rel (%p58) target = $region21
    $region20: #{tpu_custom_call.1} parent=1 // pred_region
      %v61 = vlaneseq
      %v62 = vshrl.u32 %v61, 7
      %v63 = vadd.s32 %v62, 8
      %v64 = vadd.s32 %v62, 16
      %v65 = vadd.s32 %v62, 24
      %v66 = vadd.s32 %v62, 32
      %v67 = vadd.s32 %v62, 40
      %v68 = vadd.s32 %v62, 48
      %v69 = vadd.s32 %v62, 56
      %v70 = vadd.s32 %v62, 64
      %v71 = vadd.s32 %v62, 72
      %v72 = vadd.s32 %v62, 80
      %v73 = vadd.s32 %v62, 88
      %v74 = vadd.s32 %v62, 96
      %v75 = vadd.s32 %v62, 104
      %v76 = vadd.s32 %v62, 112
      %v77 = vadd.s32 %v62, 120
      %v78 = vadd.s32 %v62, 128
      %v79 = vadd.s32 %v62, 136
      %v80 = vadd.s32 %v62, 144
      %v81 = vadd.s32 %v62, 152
      %v82 = vadd.s32 %v62, 160
      %v83 = vadd.s32 %v62, 168
      %v84 = vadd.s32 %v62, 176
      %v85 = vadd.s32 %v62, 184
      %v86 = vadd.s32 %v62, 192
      %v87 = vadd.s32 %v62, 200
      %v88 = vadd.s32 %v62, 208
      %v89 = vadd.s32 %v62, 216
      %v90 = vadd.s32 %v62, 224
      %v91 = vadd.s32 %v62, 232
      %v92 = vadd.s32 %v62, 240
      %v93 = vadd.s32 %v62, 248
      %v94 = vadd.s32 %v62, 256
      %v95 = vadd.s32 %v62, 264
      %v96 = vadd.s32 %v62, 272
      %v97 = vadd.s32 %v62, 280
      %v98 = vadd.s32 %v62, 288
      %v99 = vadd.s32 %v62, 296
      %v100 = vadd.s32 %v62, 304
      %v101 = vadd.s32 %v62, 312
      %v102 = vadd.s32 %v62, 320
      %v103 = vadd.s32 %v62, 328
      %v104 = vadd.s32 %v62, 336
      %v105 = vadd.s32 %v62, 344
      %v106 = vadd.s32 %v62, 352
      %v107 = vadd.s32 %v62, 360
      %v108 = vadd.s32 %v62, 368
      %v109 = vadd.s32 %v62, 376
      %v110 = vadd.s32 %v62, 384
      %v111 = vadd.s32 %v62, 392
      %v112 = vadd.s32 %v62, 400
      %v113 = vadd.s32 %v62, 408
      %v114 = vadd.s32 %v62, 416
      %v115 = vadd.s32 %v62, 424
      %v116 = vadd.s32 %v62, 432
      %v117 = vadd.s32 %v62, 440
      %v118 = vadd.s32 %v62, 448
      %v119 = vadd.s32 %v62, 456
      %v120 = vadd.s32 %v62, 464
      %v121 = vadd.s32 %v62, 472
      %v122 = vadd.s32 %v62, 480
      %v123 = vadd.s32 %v62, 488
      %v124 = vadd.s32 %v62, 496
      %v125 = vadd.s32 %v62, 504
      %v126 = vadd.s32 %v62, 512
      %v127 = vadd.s32 %v62, 520
      %v128 = vadd.s32 %v62, 528
      %v129 = vadd.s32 %v62, 536
      %v130 = vadd.s32 %v62, 544
      %v131 = vadd.s32 %v62, 552
      %v132 = vadd.s32 %v62, 560
      %v133 = vadd.s32 %v62, 568
      %v134 = vadd.s32 %v62, 576
      %v135 = vadd.s32 %v62, 584
      %v136 = vadd.s32 %v62, 592
      %v137 = vadd.s32 %v62, 600
      %v138 = vadd.s32 %v62, 608
      %v139 = vadd.s32 %v62, 616
      %v140 = vadd.s32 %v62, 624
      %v141 = vadd.s32 %v62, 632
      %v142 = vadd.s32 %v62, 640
      %v143 = vadd.s32 %v62, 648
      %v144 = vadd.s32 %v62, 656
      %v145 = vadd.s32 %v62, 664
      %v146 = vadd.s32 %v62, 672
      %v147 = vadd.s32 %v62, 680
      %v148 = vadd.s32 %v62, 688
      %v149 = vadd.s32 %v62, 696
      %v150 = vadd.s32 %v62, 704
      %v151 = vadd.s32 %v62, 712
      %v152 = vadd.s32 %v62, 720
      %v153 = vadd.s32 %v62, 728
      %v154 = vadd.s32 %v62, 736
      %v155 = vadd.s32 %v62, 744
      %v156 = vadd.s32 %v62, 752
      %v157 = vadd.s32 %v62, 760
      %v158 = vadd.s32 %v62, 768
      %v159 = vadd.s32 %v62, 776
      %v160 = vadd.s32 %v62, 784
      %v161 = vadd.s32 %v62, 792
      %v162 = vadd.s32 %v62, 800
      %v163 = vadd.s32 %v62, 808
      %v164 = vadd.s32 %v62, 816
      %v165 = vadd.s32 %v62, 824
      %v166 = vadd.s32 %v62, 832
      %v167 = vadd.s32 %v62, 840
      %v168 = vadd.s32 %v62, 848
      %v169 = vadd.s32 %v62, 856
      %v170 = vadd.s32 %v62, 864
      %v171 = vadd.s32 %v62, 872
      %v172 = vadd.s32 %v62, 880
      %v173 = vadd.s32 %v62, 888
      %v174 = vadd.s32 %v62, 896
      %v175 = vadd.s32 %v62, 904
      %v176 = vadd.s32 %v62, 912
      %v177 = vadd.s32 %v62, 920
      %v178 = vadd.s32 %v62, 928
      %v179 = vadd.s32 %v62, 936
      %v180 = vadd.s32 %v62, 944
      %v181 = vadd.s32 %v62, 952
      %v182 = vadd.s32 %v62, 960
      %v183 = vadd.s32 %v62, 968
      %v184 = vadd.s32 %v62, 976
      %v185 = vadd.s32 %v62, 984
      %v186 = vadd.s32 %v62, 992
      %v187 = vadd.s32 %v62, 1000
      %v188 = vadd.s32 %v62, 1008
      %v189 = vadd.s32 %v62, 1016
      %v190 = vadd.s32 %v62, 1024
      %v191 = vadd.s32 %v62, 1032
      %v192 = vadd.s32 %v62, 1040
      %v193 = vadd.s32 %v62, 1048
      %v194 = vadd.s32 %v62, 1056
      %v195 = vadd.s32 %v62, 1064
      %v196 = vadd.s32 %v62, 1072
      %v197 = vadd.s32 %v62, 1080
      %v198 = vadd.s32 %v62, 1088
      %v199 = vadd.s32 %v62, 1096
      %v200 = vadd.s32 %v62, 1104
      %v201 = vadd.s32 %v62, 1112
      %v202 = vadd.s32 %v62, 1120
      %v203 = vadd.s32 %v62, 1128
      %v204 = vadd.s32 %v62, 1136
      %v205 = vadd.s32 %v62, 1144
      %v206 = vlaneseq
      %v207 = vand.u32 %v206, 127
      %v208 = vmul.u32 %v207, 9
      %v209 = vsub.s32 %v62, %v208
      %v210 = vsub.s32 %v63, %v208
      %v211 = vsub.s32 %v64, %v208
      %v212 = vsub.s32 %v65, %v208
      %v213 = vsub.s32 %v66, %v208
      %v214 = vsub.s32 %v67, %v208
      %v215 = vsub.s32 %v68, %v208
      %v216 = vsub.s32 %v69, %v208
      %v217 = vsub.s32 %v70, %v208
      %v218 = vsub.s32 %v71, %v208
      %v219 = vsub.s32 %v72, %v208
      %v220 = vsub.s32 %v73, %v208
      %v221 = vsub.s32 %v74, %v208
      %v222 = vsub.s32 %v75, %v208
      %v223 = vsub.s32 %v76, %v208
      %v224 = vsub.s32 %v77, %v208
      %v225 = vsub.s32 %v78, %v208
      %v226 = vsub.s32 %v79, %v208
      %v227 = vsub.s32 %v80, %v208
      %v228 = vsub.s32 %v81, %v208
      %v229 = vsub.s32 %v82, %v208
      %v230 = vsub.s32 %v83, %v208
      %v231 = vsub.s32 %v84, %v208
      %v232 = vsub.s32 %v85, %v208
      %v233 = vsub.s32 %v86, %v208
      %v234 = vsub.s32 %v87, %v208
      %v235 = vsub.s32 %v88, %v208
      %v236 = vsub.s32 %v89, %v208
      %v237 = vsub.s32 %v90, %v208
      %v238 = vsub.s32 %v91, %v208
      %v239 = vsub.s32 %v92, %v208
      %v240 = vsub.s32 %v93, %v208
      %v241 = vsub.s32 %v94, %v208
      %v242 = vsub.s32 %v95, %v208
      %v243 = vsub.s32 %v96, %v208
      %v244 = vsub.s32 %v97, %v208
      %v245 = vsub.s32 %v98, %v208
      %v246 = vsub.s32 %v99, %v208
      %v247 = vsub.s32 %v100, %v208
      %v248 = vsub.s32 %v101, %v208
      %v249 = vsub.s32 %v102, %v208
      %v250 = vsub.s32 %v103, %v208
      %v251 = vsub.s32 %v104, %v208
      %v252 = vsub.s32 %v105, %v208
      %v253 = vsub.s32 %v106, %v208
      %v254 = vsub.s32 %v107, %v208
      %v255 = vsub.s32 %v108, %v208
      %v256 = vsub.s32 %v109, %v208
      %v257 = vsub.s32 %v110, %v208
      %v258 = vsub.s32 %v111, %v208
      %v259 = vsub.s32 %v112, %v208
      %v260 = vsub.s32 %v113, %v208
      %v261 = vsub.s32 %v114, %v208
      %v262 = vsub.s32 %v115, %v208
      %v263 = vsub.s32 %v116, %v208
      %v264 = vsub.s32 %v117, %v208
      %v265 = vsub.s32 %v118, %v208
      %v266 = vsub.s32 %v119, %v208
      %v267 = vsub.s32 %v120, %v208
      %v268 = vsub.s32 %v121, %v208
      %v269 = vsub.s32 %v122, %v208
      %v270 = vsub.s32 %v123, %v208
      %v271 = vsub.s32 %v124, %v208
      %v272 = vsub.s32 %v125, %v208
      %v273 = vsub.s32 %v126, %v208
      %v274 = vsub.s32 %v127, %v208
      %v275 = vsub.s32 %v128, %v208
      %v276 = vsub.s32 %v129, %v208
      %v277 = vsub.s32 %v130, %v208
      %v278 = vsub.s32 %v131, %v208
      %v279 = vsub.s32 %v132, %v208
      %v280 = vsub.s32 %v133, %v208
      %v281 = vsub.s32 %v134, %v208
      %v282 = vsub.s32 %v135, %v208
      %v283 = vsub.s32 %v136, %v208
      %v284 = vsub.s32 %v137, %v208
      %v285 = vsub.s32 %v138, %v208
      %v286 = vsub.s32 %v139, %v208
      %v287 = vsub.s32 %v140, %v208
      %v288 = vsub.s32 %v141, %v208
      %v289 = vsub.s32 %v142, %v208
      %v290 = vsub.s32 %v143, %v208
      %v291 = vsub.s32 %v144, %v208
      %v292 = vsub.s32 %v145, %v208
      %v293 = vsub.s32 %v146, %v208
      %v294 = vsub.s32 %v147, %v208
      %v295 = vsub.s32 %v148, %v208
      %v296 = vsub.s32 %v149, %v208
      %v297 = vsub.s32 %v150, %v208
      %v298 = vsub.s32 %v151, %v208
      %v299 = vsub.s32 %v152, %v208
      %v300 = vsub.s32 %v153, %v208
      %v301 = vsub.s32 %v154, %v208
      %v302 = vsub.s32 %v155, %v208
      %v303 = vsub.s32 %v156, %v208
      %v304 = vsub.s32 %v157, %v208
      %v305 = vsub.s32 %v158, %v208
      %v306 = vsub.s32 %v159, %v208
      %v307 = vsub.s32 %v160, %v208
      %v308 = vsub.s32 %v161, %v208
      %v309 = vsub.s32 %v162, %v208
      %v310 = vsub.s32 %v163, %v208
      %v311 = vsub.s32 %v164, %v208
      %v312 = vsub.s32 %v165, %v208
      %v313 = vsub.s32 %v166, %v208
      %v314 = vsub.s32 %v167, %v208
      %v315 = vsub.s32 %v168, %v208
      %v316 = vsub.s32 %v169, %v208
      %v317 = vsub.s32 %v170, %v208
      %v318 = vsub.s32 %v171, %v208
      %v319 = vsub.s32 %v172, %v208
      %v320 = vsub.s32 %v173, %v208
      %v321 = vsub.s32 %v174, %v208
      %v322 = vsub.s32 %v175, %v208
      %v323 = vsub.s32 %v176, %v208
      %v324 = vsub.s32 %v177, %v208
      %v325 = vsub.s32 %v178, %v208
      %v326 = vsub.s32 %v179, %v208
      %v327 = vsub.s32 %v180, %v208
      %v328 = vsub.s32 %v181, %v208
      %v329 = vsub.s32 %v182, %v208
      %v330 = vsub.s32 %v183, %v208
      %v331 = vsub.s32 %v184, %v208
      %v332 = vsub.s32 %v185, %v208
      %v333 = vsub.s32 %v186, %v208
      %v334 = vsub.s32 %v187, %v208
      %v335 = vsub.s32 %v188, %v208
      %v336 = vsub.s32 %v189, %v208
      %v337 = vsub.s32 %v190, %v208
      %v338 = vsub.s32 %v191, %v208
      %v339 = vsub.s32 %v192, %v208
      %v340 = vsub.s32 %v193, %v208
      %v341 = vsub.s32 %v194, %v208
      %v342 = vsub.s32 %v195, %v208
      %v343 = vsub.s32 %v196, %v208
      %v344 = vsub.s32 %v197, %v208
      %v345 = vsub.s32 %v198, %v208
      %v346 = vsub.s32 %v199, %v208
      %v347 = vsub.s32 %v200, %v208
      %v348 = vsub.s32 %v201, %v208
      %v349 = vsub.s32 %v202, %v208
      %v350 = vsub.s32 %v203, %v208
      %v351 = vsub.s32 %v204, %v208
      %v352 = vsub.s32 %v205, %v208
      %vm353 = vcmp.ge.s32.totalorder %v209, 0
      %vm354 = vcmp.ge.s32.totalorder %v210, 0
      %vm355 = vcmp.ge.s32.totalorder %v211, 0
      %vm356 = vcmp.ge.s32.totalorder %v212, 0
      %vm357 = vcmp.ge.s32.totalorder %v213, 0
      %vm358 = vcmp.ge.s32.totalorder %v214, 0
      %vm359 = vcmp.ge.s32.totalorder %v215, 0
      %vm360 = vcmp.ge.s32.totalorder %v216, 0
      %vm361 = vcmp.ge.s32.totalorder %v217, 0
      %vm362 = vcmp.ge.s32.totalorder %v218, 0
      %vm363 = vcmp.ge.s32.totalorder %v219, 0
      %vm364 = vcmp.ge.s32.totalorder %v220, 0
      %vm365 = vcmp.ge.s32.totalorder %v221, 0
      %vm366 = vcmp.ge.s32.totalorder %v222, 0
      %vm367 = vcmp.ge.s32.totalorder %v223, 0
      %vm368 = vcmp.ge.s32.totalorder %v224, 0
      %vm369 = vcmp.ge.s32.totalorder %v225, 0
      %vm370 = vcmp.ge.s32.totalorder %v226, 0
      %vm371 = vcmp.ge.s32.totalorder %v227, 0
      %vm372 = vcmp.ge.s32.totalorder %v228, 0
      %vm373 = vcmp.ge.s32.totalorder %v229, 0
      %vm374 = vcmp.ge.s32.totalorder %v230, 0
      %vm375 = vcmp.ge.s32.totalorder %v231, 0
      %vm376 = vcmp.ge.s32.totalorder %v232, 0
      %vm377 = vcmp.ge.s32.totalorder %v233, 0
      %vm378 = vcmp.ge.s32.totalorder %v234, 0
      %vm379 = vcmp.ge.s32.totalorder %v235, 0
      %vm380 = vcmp.ge.s32.totalorder %v236, 0
      %vm381 = vcmp.ge.s32.totalorder %v237, 0
      %vm382 = vcmp.ge.s32.totalorder %v238, 0
      %vm383 = vcmp.ge.s32.totalorder %v239, 0
      %vm384 = vcmp.ge.s32.totalorder %v240, 0
      %vm385 = vcmp.ge.s32.totalorder %v241, 0
      %vm386 = vcmp.ge.s32.totalorder %v242, 0
      %vm387 = vcmp.ge.s32.totalorder %v243, 0
      %vm388 = vcmp.ge.s32.totalorder %v244, 0
      %vm389 = vcmp.ge.s32.totalorder %v245, 0
      %vm390 = vcmp.ge.s32.totalorder %v246, 0
      %vm391 = vcmp.ge.s32.totalorder %v247, 0
      %vm392 = vcmp.ge.s32.totalorder %v248, 0
      %vm393 = vcmp.ge.s32.totalorder %v249, 0
      %vm394 = vcmp.ge.s32.totalorder %v250, 0
      %vm395 = vcmp.ge.s32.totalorder %v251, 0
      %vm396 = vcmp.ge.s32.totalorder %v252, 0
      %vm397 = vcmp.ge.s32.totalorder %v253, 0
      %vm398 = vcmp.ge.s32.totalorder %v254, 0
      %vm399 = vcmp.ge.s32.totalorder %v255, 0
      %vm400 = vcmp.ge.s32.totalorder %v256, 0
      %vm401 = vcmp.ge.s32.totalorder %v257, 0
      %vm402 = vcmp.ge.s32.totalorder %v258, 0
      %vm403 = vcmp.ge.s32.totalorder %v259, 0
      %vm404 = vcmp.ge.s32.totalorder %v260, 0
      %vm405 = vcmp.ge.s32.totalorder %v261, 0
      %vm406 = vcmp.ge.s32.totalorder %v262, 0
      %vm407 = vcmp.ge.s32.totalorder %v263, 0
      %vm408 = vcmp.ge.s32.totalorder %v264, 0
      %vm409 = vcmp.ge.s32.totalorder %v265, 0
      %vm410 = vcmp.ge.s32.totalorder %v266, 0
      %vm411 = vcmp.ge.s32.totalorder %v267, 0
      %vm412 = vcmp.ge.s32.totalorder %v268, 0
      %vm413 = vcmp.ge.s32.totalorder %v269, 0
      %vm414 = vcmp.ge.s32.totalorder %v270, 0
      %vm415 = vcmp.ge.s32.totalorder %v271, 0
      %vm416 = vcmp.ge.s32.totalorder %v272, 0
      %vm417 = vcmp.ge.s32.totalorder %v273, 0
      %vm418 = vcmp.ge.s32.totalorder %v274, 0
      %vm419 = vcmp.ge.s32.totalorder %v275, 0
      %vm420 = vcmp.ge.s32.totalorder %v276, 0
      %vm421 = vcmp.ge.s32.totalorder %v277, 0
      %vm422 = vcmp.ge.s32.totalorder %v278, 0
      %vm423 = vcmp.ge.s32.totalorder %v279, 0
      %vm424 = vcmp.ge.s32.totalorder %v280, 0
      %vm425 = vcmp.ge.s32.totalorder %v281, 0
      %vm426 = vcmp.ge.s32.totalorder %v282, 0
      %vm427 = vcmp.ge.s32.totalorder %v283, 0
      %vm428 = vcmp.ge.s32.totalorder %v284, 0
      %vm429 = vcmp.ge.s32.totalorder %v285, 0
      %vm430 = vcmp.ge.s32.totalorder %v286, 0
      %vm431 = vcmp.ge.s32.totalorder %v287, 0
      %vm432 = vcmp.ge.s32.totalorder %v288, 0
      %vm433 = vcmp.ge.s32.totalorder %v289, 0
      %vm434 = vcmp.ge.s32.totalorder %v290, 0
      %vm435 = vcmp.ge.s32.totalorder %v291, 0
      %vm436 = vcmp.ge.s32.totalorder %v292, 0
      %vm437 = vcmp.ge.s32.totalorder %v293, 0
      %vm438 = vcmp.ge.s32.totalorder %v294, 0
      %vm439 = vcmp.ge.s32.totalorder %v295, 0
      %vm440 = vcmp.ge.s32.totalorder %v296, 0
      %vm441 = vcmp.ge.s32.totalorder %v297, 0
      %vm442 = vcmp.ge.s32.totalorder %v298, 0
      %vm443 = vcmp.ge.s32.totalorder %v299, 0
      %vm444 = vcmp.ge.s32.totalorder %v300, 0
      %vm445 = vcmp.ge.s32.totalorder %v301, 0
      %vm446 = vcmp.ge.s32.totalorder %v302, 0
      %vm447 = vcmp.ge.s32.totalorder %v303, 0
      %vm448 = vcmp.ge.s32.totalorder %v304, 0
      %vm449 = vcmp.ge.s32.totalorder %v305, 0
      %vm450 = vcmp.ge.s32.totalorder %v306, 0
      %vm451 = vcmp.ge.s32.totalorder %v307, 0
      %vm452 = vcmp.ge.s32.totalorder %v308, 0
      %vm453 = vcmp.ge.s32.totalorder %v309, 0
      %vm454 = vcmp.ge.s32.totalorder %v310, 0
      %vm455 = vcmp.ge.s32.totalorder %v311, 0
      %vm456 = vcmp.ge.s32.totalorder %v312, 0
      %vm457 = vcmp.ge.s32.totalorder %v313, 0
      %vm458 = vcmp.ge.s32.totalorder %v314, 0
      %vm459 = vcmp.ge.s32.totalorder %v315, 0
      %vm460 = vcmp.ge.s32.totalorder %v316, 0
      %vm461 = vcmp.ge.s32.totalorder %v317, 0
      %vm462 = vcmp.ge.s32.totalorder %v318, 0
      %vm463 = vcmp.ge.s32.totalorder %v319, 0
      %vm464 = vcmp.ge.s32.totalorder %v320, 0
      %vm465 = vcmp.ge.s32.totalorder %v321, 0
      %vm466 = vcmp.ge.s32.totalorder %v322, 0
      %vm467 = vcmp.ge.s32.totalorder %v323, 0
      %vm468 = vcmp.ge.s32.totalorder %v324, 0
      %vm469 = vcmp.ge.s32.totalorder %v325, 0
      %vm470 = vcmp.ge.s32.totalorder %v326, 0
      %vm471 = vcmp.ge.s32.totalorder %v327, 0
      %vm472 = vcmp.ge.s32.totalorder %v328, 0
      %vm473 = vcmp.ge.s32.totalorder %v329, 0
      %vm474 = vcmp.ge.s32.totalorder %v330, 0
      %vm475 = vcmp.ge.s32.totalorder %v331, 0
      %vm476 = vcmp.ge.s32.totalorder %v332, 0
      %vm477 = vcmp.ge.s32.totalorder %v333, 0
      %vm478 = vcmp.ge.s32.totalorder %v334, 0
      %vm479 = vcmp.ge.s32.totalorder %v335, 0
      %vm480 = vcmp.ge.s32.totalorder %v336, 0
      %vm481 = vcmp.ge.s32.totalorder %v337, 0
      %vm482 = vcmp.ge.s32.totalorder %v338, 0
      %vm483 = vcmp.ge.s32.totalorder %v339, 0
      %vm484 = vcmp.ge.s32.totalorder %v340, 0
      %vm485 = vcmp.ge.s32.totalorder %v341, 0
      %vm486 = vcmp.ge.s32.totalorder %v342, 0
      %vm487 = vcmp.ge.s32.totalorder %v343, 0
      %vm488 = vcmp.ge.s32.totalorder %v344, 0
      %vm489 = vcmp.ge.s32.totalorder %v345, 0
      %vm490 = vcmp.ge.s32.totalorder %v346, 0
      %vm491 = vcmp.ge.s32.totalorder %v347, 0
      %vm492 = vcmp.ge.s32.totalorder %v348, 0
      %vm493 = vcmp.ge.s32.totalorder %v349, 0
      %vm494 = vcmp.ge.s32.totalorder %v350, 0
      %vm495 = vcmp.ge.s32.totalorder %v351, 0
      %vm496 = vcmp.ge.s32.totalorder %v352, 0
      %vm497 = vcmp.lt.s32.totalorder %v209, 9
      %vm498 = vcmp.lt.s32.totalorder %v210, 9
      %vm499 = vcmp.lt.s32.totalorder %v211, 9
      %vm500 = vcmp.lt.s32.totalorder %v212, 9
      %vm501 = vcmp.lt.s32.totalorder %v213, 9
      %vm502 = vcmp.lt.s32.totalorder %v214, 9
      %vm503 = vcmp.lt.s32.totalorder %v215, 9
      %vm504 = vcmp.lt.s32.totalorder %v216, 9
      %vm505 = vcmp.lt.s32.totalorder %v217, 9
      %vm506 = vcmp.lt.s32.totalorder %v218, 9
      %vm507 = vcmp.lt.s32.totalorder %v219, 9
      %vm508 = vcmp.lt.s32.totalorder %v220, 9
      %vm509 = vcmp.lt.s32.totalorder %v221, 9
      %vm510 = vcmp.lt.s32.totalorder %v222, 9
      %vm511 = vcmp.lt.s32.totalorder %v223, 9
      %vm512 = vcmp.lt.s32.totalorder %v224, 9
      %vm513 = vcmp.lt.s32.totalorder %v225, 9
      %vm514 = vcmp.lt.s32.totalorder %v226, 9
      %vm515 = vcmp.lt.s32.totalorder %v227, 9
      %vm516 = vcmp.lt.s32.totalorder %v228, 9
      %vm517 = vcmp.lt.s32.totalorder %v229, 9
      %vm518 = vcmp.lt.s32.totalorder %v230, 9
      %vm519 = vcmp.lt.s32.totalorder %v231, 9
      %vm520 = vcmp.lt.s32.totalorder %v232, 9
      %vm521 = vcmp.lt.s32.totalorder %v233, 9
      %vm522 = vcmp.lt.s32.totalorder %v234, 9
      %vm523 = vcmp.lt.s32.totalorder %v235, 9
      %vm524 = vcmp.lt.s32.totalorder %v236, 9
      %vm525 = vcmp.lt.s32.totalorder %v237, 9
      %vm526 = vcmp.lt.s32.totalorder %v238, 9
      %vm527 = vcmp.lt.s32.totalorder %v239, 9
      %vm528 = vcmp.lt.s32.totalorder %v240, 9
      %vm529 = vcmp.lt.s32.totalorder %v241, 9
      %vm530 = vcmp.lt.s32.totalorder %v242, 9
      %vm531 = vcmp.lt.s32.totalorder %v243, 9
      %vm532 = vcmp.lt.s32.totalorder %v244, 9
      %vm533 = vcmp.lt.s32.totalorder %v245, 9
      %vm534 = vcmp.lt.s32.totalorder %v246, 9
      %vm535 = vcmp.lt.s32.totalorder %v247, 9
      %vm536 = vcmp.lt.s32.totalorder %v248, 9
      %vm537 = vcmp.lt.s32.totalorder %v249, 9
      %vm538 = vcmp.lt.s32.totalorder %v250, 9
      %vm539 = vcmp.lt.s32.totalorder %v251, 9
      %vm540 = vcmp.lt.s32.totalorder %v252, 9
      %vm541 = vcmp.lt.s32.totalorder %v253, 9
      %vm542 = vcmp.lt.s32.totalorder %v254, 9
      %vm543 = vcmp.lt.s32.totalorder %v255, 9
      %vm544 = vcmp.lt.s32.totalorder %v256, 9
      %vm545 = vcmp.lt.s32.totalorder %v257, 9
      %vm546 = vcmp.lt.s32.totalorder %v258, 9
      %vm547 = vcmp.lt.s32.totalorder %v259, 9
      %vm548 = vcmp.lt.s32.totalorder %v260, 9
      %vm549 = vcmp.lt.s32.totalorder %v261, 9
      %vm550 = vcmp.lt.s32.totalorder %v262, 9
      %vm551 = vcmp.lt.s32.totalorder %v263, 9
      %vm552 = vcmp.lt.s32.totalorder %v264, 9
      %vm553 = vcmp.lt.s32.totalorder %v265, 9
      %vm554 = vcmp.lt.s32.totalorder %v266, 9
      %vm555 = vcmp.lt.s32.totalorder %v267, 9
      %vm556 = vcmp.lt.s32.totalorder %v268, 9
      %vm557 = vcmp.lt.s32.totalorder %v269, 9
      %vm558 = vcmp.lt.s32.totalorder %v270, 9
      %vm559 = vcmp.lt.s32.totalorder %v271, 9
      %vm560 = vcmp.lt.s32.totalorder %v272, 9
      %vm561 = vcmp.lt.s32.totalorder %v273, 9
      %vm562 = vcmp.lt.s32.totalorder %v274, 9
      %vm563 = vcmp.lt.s32.totalorder %v275, 9
      %vm564 = vcmp.lt.s32.totalorder %v276, 9
      %vm565 = vcmp.lt.s32.totalorder %v277, 9
      %vm566 = vcmp.lt.s32.totalorder %v278, 9
      %vm567 = vcmp.lt.s32.totalorder %v279, 9
      %vm568 = vcmp.lt.s32.totalorder %v280, 9
      %vm569 = vcmp.lt.s32.totalorder %v281, 9
      %vm570 = vcmp.lt.s32.totalorder %v282, 9
      %vm571 = vcmp.lt.s32.totalorder %v283, 9
      %vm572 = vcmp.lt.s32.totalorder %v284, 9
      %vm573 = vcmp.lt.s32.totalorder %v285, 9
      %vm574 = vcmp.lt.s32.totalorder %v286, 9
      %vm575 = vcmp.lt.s32.totalorder %v287, 9
      %vm576 = vcmp.lt.s32.totalorder %v288, 9
      %vm577 = vcmp.lt.s32.totalorder %v289, 9
      %vm578 = vcmp.lt.s32.totalorder %v290, 9
      %vm579 = vcmp.lt.s32.totalorder %v291, 9
      %vm580 = vcmp.lt.s32.totalorder %v292, 9
      %vm581 = vcmp.lt.s32.totalorder %v293, 9
      %vm582 = vcmp.lt.s32.totalorder %v294, 9
      %vm583 = vcmp.lt.s32.totalorder %v295, 9
      %vm584 = vcmp.lt.s32.totalorder %v296, 9
      %vm585 = vcmp.lt.s32.totalorder %v297, 9
      %vm586 = vcmp.lt.s32.totalorder %v298, 9
      %vm587 = vcmp.lt.s32.totalorder %v299, 9
      %vm588 = vcmp.lt.s32.totalorder %v300, 9
      %vm589 = vcmp.lt.s32.totalorder %v301, 9
      %vm590 = vcmp.lt.s32.totalorder %v302, 9
      %vm591 = vcmp.lt.s32.totalorder %v303, 9
      %vm592 = vcmp.lt.s32.totalorder %v304, 9
      %vm593 = vcmp.lt.s32.totalorder %v305, 9
      %vm594 = vcmp.lt.s32.totalorder %v306, 9
      %vm595 = vcmp.lt.s32.totalorder %v307, 9
      %vm596 = vcmp.lt.s32.totalorder %v308, 9
      %vm597 = vcmp.lt.s32.totalorder %v309, 9
      %vm598 = vcmp.lt.s32.totalorder %v310, 9
      %vm599 = vcmp.lt.s32.totalorder %v311, 9
      %vm600 = vcmp.lt.s32.totalorder %v312, 9
      %vm601 = vcmp.lt.s32.totalorder %v313, 9
      %vm602 = vcmp.lt.s32.totalorder %v314, 9
      %vm603 = vcmp.lt.s32.totalorder %v315, 9
      %vm604 = vcmp.lt.s32.totalorder %v316, 9
      %vm605 = vcmp.lt.s32.totalorder %v317, 9
      %vm606 = vcmp.lt.s32.totalorder %v318, 9
      %vm607 = vcmp.lt.s32.totalorder %v319, 9
      %vm608 = vcmp.lt.s32.totalorder %v320, 9
      %vm609 = vcmp.lt.s32.totalorder %v321, 9
      %vm610 = vcmp.lt.s32.totalorder %v322, 9
      %vm611 = vcmp.lt.s32.totalorder %v323, 9
      %vm612 = vcmp.lt.s32.totalorder %v324, 9
      %vm613 = vcmp.lt.s32.totalorder %v325, 9
      %vm614 = vcmp.lt.s32.totalorder %v326, 9
      %vm615 = vcmp.lt.s32.totalorder %v327, 9
      %vm616 = vcmp.lt.s32.totalorder %v328, 9
      %vm617 = vcmp.lt.s32.totalorder %v329, 9
      %vm618 = vcmp.lt.s32.totalorder %v330, 9
      %vm619 = vcmp.lt.s32.totalorder %v331, 9
      %vm620 = vcmp.lt.s32.totalorder %v332, 9
      %vm621 = vcmp.lt.s32.totalorder %v333, 9
      %vm622 = vcmp.lt.s32.totalorder %v334, 9
      %vm623 = vcmp.lt.s32.totalorder %v335, 9
      %vm624 = vcmp.lt.s32.totalorder %v336, 9
      %vm625 = vcmp.lt.s32.totalorder %v337, 9
      %vm626 = vcmp.lt.s32.totalorder %v338, 9
      %vm627 = vcmp.lt.s32.totalorder %v339, 9
      %vm628 = vcmp.lt.s32.totalorder %v340, 9
      %vm629 = vcmp.lt.s32.totalorder %v341, 9
      %vm630 = vcmp.lt.s32.totalorder %v342, 9
      %vm631 = vcmp.lt.s32.totalorder %v343, 9
      %vm632 = vcmp.lt.s32.totalorder %v344, 9
      %vm633 = vcmp.lt.s32.totalorder %v345, 9
      %vm634 = vcmp.lt.s32.totalorder %v346, 9
      %vm635 = vcmp.lt.s32.totalorder %v347, 9
      %vm636 = vcmp.lt.s32.totalorder %v348, 9
      %vm637 = vcmp.lt.s32.totalorder %v349, 9
      %vm638 = vcmp.lt.s32.totalorder %v350, 9
      %vm639 = vcmp.lt.s32.totalorder %v351, 9
      %vm640 = vcmp.lt.s32.totalorder %v352, 9
      %vm641 = vmand %vm353, %vm497
      %vm642 = vmand %vm354, %vm498
      %vm643 = vmand %vm355, %vm499
      %vm644 = vmand %vm356, %vm500
      %vm645 = vmand %vm357, %vm501
      %vm646 = vmand %vm358, %vm502
      %vm647 = vmand %vm359, %vm503
      %vm648 = vmand %vm360, %vm504
      %vm649 = vmand %vm361, %vm505
      %vm650 = vmand %vm362, %vm506
      %vm651 = vmand %vm363, %vm507
      %vm652 = vmand %vm364, %vm508
      %vm653 = vmand %vm365, %vm509
      %vm654 = vmand %vm366, %vm510
      %vm655 = vmand %vm367, %vm511
      %vm656 = vmand %vm368, %vm512
      %vm657 = vmand %vm369, %vm513
      %vm658 = vmand %vm370, %vm514
      %vm659 = vmand %vm371, %vm515
      %vm660 = vmand %vm372, %vm516
      %vm661 = vmand %vm373, %vm517
      %vm662 = vmand %vm374, %vm518
      %vm663 = vmand %vm375, %vm519
      %vm664 = vmand %vm376, %vm520
      %vm665 = vmand %vm377, %vm521
      %vm666 = vmand %vm378, %vm522
      %vm667 = vmand %vm379, %vm523
      %vm668 = vmand %vm380, %vm524
      %vm669 = vmand %vm381, %vm525
      %vm670 = vmand %vm382, %vm526
      %vm671 = vmand %vm383, %vm527
      %vm672 = vmand %vm384, %vm528
      %vm673 = vmand %vm385, %vm529
      %vm674 = vmand %vm386, %vm530
      %vm675 = vmand %vm387, %vm531
      %vm676 = vmand %vm388, %vm532
      %vm677 = vmand %vm389, %vm533
      %vm678 = vmand %vm390, %vm534
      %vm679 = vmand %vm391, %vm535
      %vm680 = vmand %vm392, %vm536
      %vm681 = vmand %vm393, %vm537
      %vm682 = vmand %vm394, %vm538
      %vm683 = vmand %vm395, %vm539
      %vm684 = vmand %vm396, %vm540
      %vm685 = vmand %vm397, %vm541
      %vm686 = vmand %vm398, %vm542
      %vm687 = vmand %vm399, %vm543
      %vm688 = vmand %vm400, %vm544
      %vm689 = vmand %vm401, %vm545
      %vm690 = vmand %vm402, %vm546
      %vm691 = vmand %vm403, %vm547
      %vm692 = vmand %vm404, %vm548
      %vm693 = vmand %vm405, %vm549
      %vm694 = vmand %vm406, %vm550
      %vm695 = vmand %vm407, %vm551
      %vm696 = vmand %vm408, %vm552
      %vm697 = vmand %vm409, %vm553
      %vm698 = vmand %vm410, %vm554
      %vm699 = vmand %vm411, %vm555
      %vm700 = vmand %vm412, %vm556
      %vm701 = vmand %vm413, %vm557
      %vm702 = vmand %vm414, %vm558
      %vm703 = vmand %vm415, %vm559
      %vm704 = vmand %vm416, %vm560
      %vm705 = vmand %vm417, %vm561
      %vm706 = vmand %vm418, %vm562
      %vm707 = vmand %vm419, %vm563
      %vm708 = vmand %vm420, %vm564
      %vm709 = vmand %vm421, %vm565
      %vm710 = vmand %vm422, %vm566
      %vm711 = vmand %vm423, %vm567
      %vm712 = vmand %vm424, %vm568
      %vm713 = vmand %vm425, %vm569
      %vm714 = vmand %vm426, %vm570
      %vm715 = vmand %vm427, %vm571
      %vm716 = vmand %vm428, %vm572
      %vm717 = vmand %vm429, %vm573
      %vm718 = vmand %vm430, %vm574
      %vm719 = vmand %vm431, %vm575
      %vm720 = vmand %vm432, %vm576
      %vm721 = vmand %vm433, %vm577
      %vm722 = vmand %vm434, %vm578
      %vm723 = vmand %vm435, %vm579
      %vm724 = vmand %vm436, %vm580
      %vm725 = vmand %vm437, %vm581
      %vm726 = vmand %vm438, %vm582
      %vm727 = vmand %vm439, %vm583
      %vm728 = vmand %vm440, %vm584
      %vm729 = vmand %vm441, %vm585
      %vm730 = vmand %vm442, %vm586
      %vm731 = vmand %vm443, %vm587
      %vm732 = vmand %vm444, %vm588
      %vm733 = vmand %vm445, %vm589
      %vm734 = vmand %vm446, %vm590
      %vm735 = vmand %vm447, %vm591
      %vm736 = vmand %vm448, %vm592
      %vm737 = vmand %vm449, %vm593
      %vm738 = vmand %vm450, %vm594
      %vm739 = vmand %vm451, %vm595
      %vm740 = vmand %vm452, %vm596
      %vm741 = vmand %vm453, %vm597
      %vm742 = vmand %vm454, %vm598
      %vm743 = vmand %vm455, %vm599
      %vm744 = vmand %vm456, %vm600
      %vm745 = vmand %vm457, %vm601
      %vm746 = vmand %vm458, %vm602
      %vm747 = vmand %vm459, %vm603
      %vm748 = vmand %vm460, %vm604
      %vm749 = vmand %vm461, %vm605
      %vm750 = vmand %vm462, %vm606
      %vm751 = vmand %vm463, %vm607
      %vm752 = vmand %vm464, %vm608
      %vm753 = vmand %vm465, %vm609
      %vm754 = vmand %vm466, %vm610
      %vm755 = vmand %vm467, %vm611
      %vm756 = vmand %vm468, %vm612
      %vm757 = vmand %vm469, %vm613
      %vm758 = vmand %vm470, %vm614
      %vm759 = vmand %vm471, %vm615
      %vm760 = vmand %vm472, %vm616
      %vm761 = vmand %vm473, %vm617
      %vm762 = vmand %vm474, %vm618
      %vm763 = vmand %vm475, %vm619
      %vm764 = vmand %vm476, %vm620
      %vm765 = vmand %vm477, %vm621
      %vm766 = vmand %vm478, %vm622
      %vm767 = vmand %vm479, %vm623
      %vm768 = vmand %vm480, %vm624
      %vm769 = vmand %vm481, %vm625
      %vm770 = vmand %vm482, %vm626
      %vm771 = vmand %vm483, %vm627
      %vm772 = vmand %vm484, %vm628
      %vm773 = vmand %vm485, %vm629
      %vm774 = vmand %vm486, %vm630
      %vm775 = vmand %vm487, %vm631
      %vm776 = vmand %vm488, %vm632
      %vm777 = vmand %vm489, %vm633
      %vm778 = vmand %vm490, %vm634
      %vm779 = vmand %vm491, %vm635
      %vm780 = vmand %vm492, %vm636
      %vm781 = vmand %vm493, %vm637
      %vm782 = vmand %vm494, %vm638
      %vm783 = vmand %vm495, %vm639
      %vm784 = vmand %vm496, %vm640
      %v785 = vsel %vm641, 1.0, 0.0
      %v786 = vsel %vm642, 1.0, 0.0
      %v787 = vsel %vm643, 1.0, 0.0
      %v788 = vsel %vm644, 1.0, 0.0
      %v789 = vsel %vm645, 1.0, 0.0
      %v790 = vsel %vm646, 1.0, 0.0
      %v791 = vsel %vm647, 1.0, 0.0
      %v792 = vsel %vm648, 1.0, 0.0
      %v793 = vsel %vm649, 1.0, 0.0
      %v794 = vsel %vm650, 1.0, 0.0
      %v795 = vsel %vm651, 1.0, 0.0
      %v796 = vsel %vm652, 1.0, 0.0
      %v797 = vsel %vm653, 1.0, 0.0
      %v798 = vsel %vm654, 1.0, 0.0
      %v799 = vsel %vm655, 1.0, 0.0
      %v800 = vsel %vm656, 1.0, 0.0
      %v801 = vsel %vm657, 1.0, 0.0
      %v802 = vsel %vm658, 1.0, 0.0
      %v803 = vsel %vm659, 1.0, 0.0
      %v804 = vsel %vm660, 1.0, 0.0
      %v805 = vsel %vm661, 1.0, 0.0
      %v806 = vsel %vm662, 1.0, 0.0
      %v807 = vsel %vm663, 1.0, 0.0
      %v808 = vsel %vm664, 1.0, 0.0
      %v809 = vsel %vm665, 1.0, 0.0
      %v810 = vsel %vm666, 1.0, 0.0
      %v811 = vsel %vm667, 1.0, 0.0
      %v812 = vsel %vm668, 1.0, 0.0
      %v813 = vsel %vm669, 1.0, 0.0
      %v814 = vsel %vm670, 1.0, 0.0
      %v815 = vsel %vm671, 1.0, 0.0
      %v816 = vsel %vm672, 1.0, 0.0
      %v817 = vsel %vm673, 1.0, 0.0
      %v818 = vsel %vm674, 1.0, 0.0
      %v819 = vsel %vm675, 1.0, 0.0
      %v820 = vsel %vm676, 1.0, 0.0
      %v821 = vsel %vm677, 1.0, 0.0
      %v822 = vsel %vm678, 1.0, 0.0
      %v823 = vsel %vm679, 1.0, 0.0
      %v824 = vsel %vm680, 1.0, 0.0
      %v825 = vsel %vm681, 1.0, 0.0
      %v826 = vsel %vm682, 1.0, 0.0
      %v827 = vsel %vm683, 1.0, 0.0
      %v828 = vsel %vm684, 1.0, 0.0
      %v829 = vsel %vm685, 1.0, 0.0
      %v830 = vsel %vm686, 1.0, 0.0
      %v831 = vsel %vm687, 1.0, 0.0
      %v832 = vsel %vm688, 1.0, 0.0
      %v833 = vsel %vm689, 1.0, 0.0
      %v834 = vsel %vm690, 1.0, 0.0
      %v835 = vsel %vm691, 1.0, 0.0
      %v836 = vsel %vm692, 1.0, 0.0
      %v837 = vsel %vm693, 1.0, 0.0
      %v838 = vsel %vm694, 1.0, 0.0
      %v839 = vsel %vm695, 1.0, 0.0
      %v840 = vsel %vm696, 1.0, 0.0
      %v841 = vsel %vm697, 1.0, 0.0
      %v842 = vsel %vm698, 1.0, 0.0
      %v843 = vsel %vm699, 1.0, 0.0
      %v844 = vsel %vm700, 1.0, 0.0
      %v845 = vsel %vm701, 1.0, 0.0
      %v846 = vsel %vm702, 1.0, 0.0
      %v847 = vsel %vm703, 1.0, 0.0
      %v848 = vsel %vm704, 1.0, 0.0
      %v849 = vsel %vm705, 1.0, 0.0
      %v850 = vsel %vm706, 1.0, 0.0
      %v851 = vsel %vm707, 1.0, 0.0
      %v852 = vsel %vm708, 1.0, 0.0
      %v853 = vsel %vm709, 1.0, 0.0
      %v854 = vsel %vm710, 1.0, 0.0
      %v855 = vsel %vm711, 1.0, 0.0
      %v856 = vsel %vm712, 1.0, 0.0
      %v857 = vsel %vm713, 1.0, 0.0
      %v858 = vsel %vm714, 1.0, 0.0
      %v859 = vsel %vm715, 1.0, 0.0
      %v860 = vsel %vm716, 1.0, 0.0
      %v861 = vsel %vm717, 1.0, 0.0
      %v862 = vsel %vm718, 1.0, 0.0
      %v863 = vsel %vm719, 1.0, 0.0
      %v864 = vsel %vm720, 1.0, 0.0
      %v865 = vsel %vm721, 1.0, 0.0
      %v866 = vsel %vm722, 1.0, 0.0
      %v867 = vsel %vm723, 1.0, 0.0
      %v868 = vsel %vm724, 1.0, 0.0
      %v869 = vsel %vm725, 1.0, 0.0
      %v870 = vsel %vm726, 1.0, 0.0
      %v871 = vsel %vm727, 1.0, 0.0
      %v872 = vsel %vm728, 1.0, 0.0
      %v873 = vsel %vm729, 1.0, 0.0
      %v874 = vsel %vm730, 1.0, 0.0
      %v875 = vsel %vm731, 1.0, 0.0
      %v876 = vsel %vm732, 1.0, 0.0
      %v877 = vsel %vm733, 1.0, 0.0
      %v878 = vsel %vm734, 1.0, 0.0
      %v879 = vsel %vm735, 1.0, 0.0
      %v880 = vsel %vm736, 1.0, 0.0
      %v881 = vsel %vm737, 1.0, 0.0
      %v882 = vsel %vm738, 1.0, 0.0
      %v883 = vsel %vm739, 1.0, 0.0
      %v884 = vsel %vm740, 1.0, 0.0
      %v885 = vsel %vm741, 1.0, 0.0
      %v886 = vsel %vm742, 1.0, 0.0
      %v887 = vsel %vm743, 1.0, 0.0
      %v888 = vsel %vm744, 1.0, 0.0
      %v889 = vsel %vm745, 1.0, 0.0
      %v890 = vsel %vm746, 1.0, 0.0
      %v891 = vsel %vm747, 1.0, 0.0
      %v892 = vsel %vm748, 1.0, 0.0
      %v893 = vsel %vm749, 1.0, 0.0
      %v894 = vsel %vm750, 1.0, 0.0
      %v895 = vsel %vm751, 1.0, 0.0
      %v896 = vsel %vm752, 1.0, 0.0
      %v897 = vsel %vm753, 1.0, 0.0
      %v898 = vsel %vm754, 1.0, 0.0
      %v899 = vsel %vm755, 1.0, 0.0
      %v900 = vsel %vm756, 1.0, 0.0
      %v901 = vsel %vm757, 1.0, 0.0
      %v902 = vsel %vm758, 1.0, 0.0
      %v903 = vsel %vm759, 1.0, 0.0
      %v904 = vsel %vm760, 1.0, 0.0
      %v905 = vsel %vm761, 1.0, 0.0
      %v906 = vsel %vm762, 1.0, 0.0
      %v907 = vsel %vm763, 1.0, 0.0
      %v908 = vsel %vm764, 1.0, 0.0
      %v909 = vsel %vm765, 1.0, 0.0
      %v910 = vsel %vm766, 1.0, 0.0
      %v911 = vsel %vm767, 1.0, 0.0
      %v912 = vsel %vm768, 1.0, 0.0
      %v913 = vsel %vm769, 1.0, 0.0
      %v914 = vsel %vm770, 1.0, 0.0
      %v915 = vsel %vm771, 1.0, 0.0
      %v916 = vsel %vm772, 1.0, 0.0
      %v917 = vsel %vm773, 1.0, 0.0
      %v918 = vsel %vm774, 1.0, 0.0
      %v919 = vsel %vm775, 1.0, 0.0
      %v920 = vsel %vm776, 1.0, 0.0
      %v921 = vsel %vm777, 1.0, 0.0
      %v922 = vsel %vm778, 1.0, 0.0
      %v923 = vsel %vm779, 1.0, 0.0
      %v924 = vsel %vm780, 1.0, 0.0
      %v925 = vsel %vm781, 1.0, 0.0
      %v926 = vsel %vm782, 1.0, 0.0
      %v927 = vsel %vm783, 1.0, 0.0
      %v928 = vsel %vm784, 1.0, 0.0
      %v929 = vpack.c.bf16 %v785, %v785
      %v930 = vpack.c.bf16 %v786, %v786
      %v931 = vpack.c.bf16 %v787, %v787
      %v932 = vpack.c.bf16 %v788, %v788
      %v933 = vpack.c.bf16 %v789, %v789
      %v934 = vpack.c.bf16 %v790, %v790
      %v935 = vpack.c.bf16 %v791, %v791
      %v936 = vpack.c.bf16 %v792, %v792
      %v937 = vpack.c.bf16 %v793, %v793
      %v938 = vpack.c.bf16 %v794, %v794
      %v939 = vpack.c.bf16 %v795, %v795
      %v940 = vpack.c.bf16 %v796, %v796
      %v941 = vpack.c.bf16 %v797, %v797
      %v942 = vpack.c.bf16 %v798, %v798
      %v943 = vpack.c.bf16 %v799, %v799
      %v944 = vpack.c.bf16 %v800, %v800
      %v945 = vpack.c.bf16 %v801, %v801
      %v946 = vpack.c.bf16 %v802, %v802
      %v947 = vpack.c.bf16 %v803, %v803
      %v948 = vpack.c.bf16 %v804, %v804
      %v949 = vpack.c.bf16 %v805, %v805
      %v950 = vpack.c.bf16 %v806, %v806
      %v951 = vpack.c.bf16 %v807, %v807
      %v952 = vpack.c.bf16 %v808, %v808
      %v953 = vpack.c.bf16 %v809, %v809
      %v954 = vpack.c.bf16 %v810, %v810
      %v955 = vpack.c.bf16 %v811, %v811
      %v956 = vpack.c.bf16 %v812, %v812
      %v957 = vpack.c.bf16 %v813, %v813
      %v958 = vpack.c.bf16 %v814, %v814
      %v959 = vpack.c.bf16 %v815, %v815
      %v960 = vpack.c.bf16 %v816, %v816
      %v961 = vpack.c.bf16 %v817, %v817
      %v962 = vpack.c.bf16 %v818, %v818
      %v963 = vpack.c.bf16 %v819, %v819
      %v964 = vpack.c.bf16 %v820, %v820
      %v965 = vpack.c.bf16 %v821, %v821
      %v966 = vpack.c.bf16 %v822, %v822
      %v967 = vpack.c.bf16 %v823, %v823
      %v968 = vpack.c.bf16 %v824, %v824
      %v969 = vpack.c.bf16 %v825, %v825
      %v970 = vpack.c.bf16 %v826, %v826
      %v971 = vpack.c.bf16 %v827, %v827
      %v972 = vpack.c.bf16 %v828, %v828
      %v973 = vpack.c.bf16 %v829, %v829
      %v974 = vpack.c.bf16 %v830, %v830
      %v975 = vpack.c.bf16 %v831, %v831
      %v976 = vpack.c.bf16 %v832, %v832
      %v977 = vpack.c.bf16 %v833, %v833
      %v978 = vpack.c.bf16 %v834, %v834
      %v979 = vpack.c.bf16 %v835, %v835
      %v980 = vpack.c.bf16 %v836, %v836
      %v981 = vpack.c.bf16 %v837, %v837
      %v982 = vpack.c.bf16 %v838, %v838
      %v983 = vpack.c.bf16 %v839, %v839
      %v984 = vpack.c.bf16 %v840, %v840
      %v985 = vpack.c.bf16 %v841, %v841
      %v986 = vpack.c.bf16 %v842, %v842
      %v987 = vpack.c.bf16 %v843, %v843
      %v988 = vpack.c.bf16 %v844, %v844
      %v989 = vpack.c.bf16 %v845, %v845
      %v990 = vpack.c.bf16 %v846, %v846
      %v991 = vpack.c.bf16 %v847, %v847
      %v992 = vpack.c.bf16 %v848, %v848
      %v993 = vpack.c.bf16 %v849, %v849
      %v994 = vpack.c.bf16 %v850, %v850
      %v995 = vpack.c.bf16 %v851, %v851
      %v996 = vpack.c.bf16 %v852, %v852
      %v997 = vpack.c.bf16 %v853, %v853
      %v998 = vpack.c.bf16 %v854, %v854
      %v999 = vpack.c.bf16 %v855, %v855
      %v1000 = vpack.c.bf16 %v856, %v856
      %v1001 = vpack.c.bf16 %v857, %v857
      %v1002 = vpack.c.bf16 %v858, %v858
      %v1003 = vpack.c.bf16 %v859, %v859
      %v1004 = vpack.c.bf16 %v860, %v860
      %v1005 = vpack.c.bf16 %v861, %v861
      %v1006 = vpack.c.bf16 %v862, %v862
      %v1007 = vpack.c.bf16 %v863, %v863
      %v1008 = vpack.c.bf16 %v864, %v864
      %v1009 = vpack.c.bf16 %v865, %v865
      %v1010 = vpack.c.bf16 %v866, %v866
      %v1011 = vpack.c.bf16 %v867, %v867
      %v1012 = vpack.c.bf16 %v868, %v868
      %v1013 = vpack.c.bf16 %v869, %v869
      %v1014 = vpack.c.bf16 %v870, %v870
      %v1015 = vpack.c.bf16 %v871, %v871
      %v1016 = vpack.c.bf16 %v872, %v872
      %v1017 = vpack.c.bf16 %v873, %v873
      %v1018 = vpack.c.bf16 %v874, %v874
      %v1019 = vpack.c.bf16 %v875, %v875
      %v1020 = vpack.c.bf16 %v876, %v876
      %v1021 = vpack.c.bf16 %v877, %v877
      %v1022 = vpack.c.bf16 %v878, %v878
      %v1023 = vpack.c.bf16 %v879, %v879
      %v1024 = vpack.c.bf16 %v880, %v880
      %v1025 = vpack.c.bf16 %v881, %v881
      %v1026 = vpack.c.bf16 %v882, %v882
      %v1027 = vpack.c.bf16 %v883, %v883
      %v1028 = vpack.c.bf16 %v884, %v884
      %v1029 = vpack.c.bf16 %v885, %v885
      %v1030 = vpack.c.bf16 %v886, %v886
      %v1031 = vpack.c.bf16 %v887, %v887
      %v1032 = vpack.c.bf16 %v888, %v888
      %v1033 = vpack.c.bf16 %v889, %v889
      %v1034 = vpack.c.bf16 %v890, %v890
      %v1035 = vpack.c.bf16 %v891, %v891
      %v1036 = vpack.c.bf16 %v892, %v892
      %v1037 = vpack.c.bf16 %v893, %v893
      %v1038 = vpack.c.bf16 %v894, %v894
      %v1039 = vpack.c.bf16 %v895, %v895
      %v1040 = vpack.c.bf16 %v896, %v896
      %v1041 = vpack.c.bf16 %v897, %v897
      %v1042 = vpack.c.bf16 %v898, %v898
      %v1043 = vpack.c.bf16 %v899, %v899
      %v1044 = vpack.c.bf16 %v900, %v900
      %v1045 = vpack.c.bf16 %v901, %v901
      %v1046 = vpack.c.bf16 %v902, %v902
      %v1047 = vpack.c.bf16 %v903, %v903
      %v1048 = vpack.c.bf16 %v904, %v904
      %v1049 = vpack.c.bf16 %v905, %v905
      %v1050 = vpack.c.bf16 %v906, %v906
      %v1051 = vpack.c.bf16 %v907, %v907
      %v1052 = vpack.c.bf16 %v908, %v908
      %v1053 = vpack.c.bf16 %v909, %v909
      %v1054 = vpack.c.bf16 %v910, %v910
      %v1055 = vpack.c.bf16 %v911, %v911
      %v1056 = vpack.c.bf16 %v912, %v912
      %v1057 = vpack.c.bf16 %v913, %v913
      %v1058 = vpack.c.bf16 %v914, %v914
      %v1059 = vpack.c.bf16 %v915, %v915
      %v1060 = vpack.c.bf16 %v916, %v916
      %v1061 = vpack.c.bf16 %v917, %v917
      %v1062 = vpack.c.bf16 %v918, %v918
      %v1063 = vpack.c.bf16 %v919, %v919
      %v1064 = vpack.c.bf16 %v920, %v920
      %v1065 = vpack.c.bf16 %v921, %v921
      %v1066 = vpack.c.bf16 %v922, %v922
      %v1067 = vpack.c.bf16 %v923, %v923
      %v1068 = vpack.c.bf16 %v924, %v924
      %v1069 = vpack.c.bf16 %v925, %v925
      %v1070 = vpack.c.bf16 %v926, %v926
      %v1071 = vpack.c.bf16 %v927, %v927
      %v1072 = vpack.c.bf16 %v928, %v928
      %1073 = vst [vmem:[#allocation2] sm:$0xf] %v929
      %1074 = vst [vmem:[#allocation2 + $0x4] sm:$0xf] %v930
      %1075 = vst [vmem:[#allocation2 + $0x8] sm:$0xf] %v931
      %1076 = vst [vmem:[#allocation2 + $0xc] sm:$0xf] %v932
      %1077 = vst [vmem:[#allocation2 + $0x10] sm:$0xf] %v933
      %1078 = vst [vmem:[#allocation2 + $0x14] sm:$0xf] %v934
      %1079 = vst [vmem:[#allocation2 + $0x18] sm:$0xf] %v935
      %1080 = vst [vmem:[#allocation2 + $0x1c] sm:$0xf] %v936
      %1081 = vst [vmem:[#allocation2 + $0x20] sm:$0xf] %v937
      %1082 = vst [vmem:[#allocation2 + $0x24] sm:$0xf] %v938
      %1083 = vst [vmem:[#allocation2 + $0x28] sm:$0xf] %v939
      %1084 = vst [vmem:[#allocation2 + $0x2c] sm:$0xf] %v940
      %1085 = vst [vmem:[#allocation2 + $0x30] sm:$0xf] %v941
      %1086 = vst [vmem:[#allocation2 + $0x34] sm:$0xf] %v942
      %1087 = vst [vmem:[#allocation2 + $0x38] sm:$0xf] %v943
      %1088 = vst [vmem:[#allocation2 + $0x3c] sm:$0xf] %v944
      %1089 = vst [vmem:[#allocation2 + $0x40] sm:$0xf] %v945
      %1090 = vst [vmem:[#allocation2 + $0x44] sm:$0xf] %v946
      %1091 = vst [vmem:[#allocation2 + $0x48] sm:$0xf] %v947
      %1092 = vst [vmem:[#allocation2 + $0x4c] sm:$0xf] %v948
      %1093 = vst [vmem:[#allocation2 + $0x50] sm:$0xf] %v949
      %1094 = vst [vmem:[#allocation2 + $0x54] sm:$0xf] %v950
      %1095 = vst [vmem:[#allocation2 + $0x58] sm:$0xf] %v951
      %1096 = vst [vmem:[#allocation2 + $0x5c] sm:$0xf] %v952
      %1097 = vst [vmem:[#allocation2 + $0x60] sm:$0xf] %v953
      %1098 = vst [vmem:[#allocation2 + $0x64] sm:$0xf] %v954
      %1099 = vst [vmem:[#allocation2 + $0x68] sm:$0xf] %v955
      %1100 = vst [vmem:[#allocation2 + $0x6c] sm:$0xf] %v956
      %1101 = vst [vmem:[#allocation2 + $0x70] sm:$0xf] %v957
      %1102 = vst [vmem:[#allocation2 + $0x74] sm:$0xf] %v958
      %1103 = vst [vmem:[#allocation2 + $0x78] sm:$0xf] %v959
      %1104 = vst [vmem:[#allocation2 + $0x7c] sm:$0xf] %v960
      %1105 = vst [vmem:[#allocation2 + $0x80] sm:$0xf] %v961
      %1106 = vst [vmem:[#allocation2 + $0x84] sm:$0xf] %v962
      %1107 = vst [vmem:[#allocation2 + $0x88] sm:$0xf] %v963
      %1108 = vst [vmem:[#allocation2 + $0x8c] sm:$0xf] %v964
      %1109 = vst [vmem:[#allocation2 + $0x90] sm:$0xf] %v965
      %1110 = vst [vmem:[#allocation2 + $0x94] sm:$0xf] %v966
      %1111 = vst [vmem:[#allocation2 + $0x98] sm:$0xf] %v967
      %1112 = vst [vmem:[#allocation2 + $0x9c] sm:$0xf] %v968
      %1113 = vst [vmem:[#allocation2 + $0xa0] sm:$0xf] %v969
      %1114 = vst [vmem:[#allocation2 + $0xa4] sm:$0xf] %v970
      %1115 = vst [vmem:[#allocation2 + $0xa8] sm:$0xf] %v971
      %1116 = vst [vmem:[#allocation2 + $0xac] sm:$0xf] %v972
      %1117 = vst [vmem:[#allocation2 + $0xb0] sm:$0xf] %v973
      %1118 = vst [vmem:[#allocation2 + $0xb4] sm:$0xf] %v974
      %1119 = vst [vmem:[#allocation2 + $0xb8] sm:$0xf] %v975
      %1120 = vst [vmem:[#allocation2 + $0xbc] sm:$0xf] %v976
      %1121 = vst [vmem:[#allocation2 + $0xc0] sm:$0xf] %v977
      %1122 = vst [vmem:[#allocation2 + $0xc4] sm:$0xf] %v978
      %1123 = vst [vmem:[#allocation2 + $0xc8] sm:$0xf] %v979
      %1124 = vst [vmem:[#allocation2 + $0xcc] sm:$0xf] %v980
      %1125 = vst [vmem:[#allocation2 + $0xd0] sm:$0xf] %v981
      %1126 = vst [vmem:[#allocation2 + $0xd4] sm:$0xf] %v982
      %1127 = vst [vmem:[#allocation2 + $0xd8] sm:$0xf] %v983
      %1128 = vst [vmem:[#allocation2 + $0xdc] sm:$0xf] %v984
      %1129 = vst [vmem:[#allocation2 + $0xe0] sm:$0xf] %v985
      %1130 = vst [vmem:[#allocation2 + $0xe4] sm:$0xf] %v986
      %1131 = vst [vmem:[#allocation2 + $0xe8] sm:$0xf] %v987
      %1132 = vst [vmem:[#allocation2 + $0xec] sm:$0xf] %v988
      %1133 = vst [vmem:[#allocation2 + $0xf0] sm:$0xf] %v989
      %1134 = vst [vmem:[#allocation2 + $0xf4] sm:$0xf] %v990
      %1135 = vst [vmem:[#allocation2 + $0xf8] sm:$0xf] %v991
      %1136 = vst [vmem:[#allocation2 + $0xfc] sm:$0xf] %v992
      %1137 = vst [vmem:[#allocation2 + $0x100] sm:$0xf] %v993
      %1138 = vst [vmem:[#allocation2 + $0x104] sm:$0xf] %v994
      %1139 = vst [vmem:[#allocation2 + $0x108] sm:$0xf] %v995
      %1140 = vst [vmem:[#allocation2 + $0x10c] sm:$0xf] %v996
      %1141 = vst [vmem:[#allocation2 + $0x110] sm:$0xf] %v997
      %1142 = vst [vmem:[#allocation2 + $0x114] sm:$0xf] %v998
      %1143 = vst [vmem:[#allocation2 + $0x118] sm:$0xf] %v999
      %1144 = vst [vmem:[#allocation2 + $0x11c] sm:$0xf] %v1000
      %1145 = vst [vmem:[#allocation2 + $0x120] sm:$0xf] %v1001
      %1146 = vst [vmem:[#allocation2 + $0x124] sm:$0xf] %v1002
      %1147 = vst [vmem:[#allocation2 + $0x128] sm:$0xf] %v1003
      %1148 = vst [vmem:[#allocation2 + $0x12c] sm:$0xf] %v1004
      %1149 = vst [vmem:[#allocation2 + $0x130] sm:$0xf] %v1005
      %1150 = vst [vmem:[#allocation2 + $0x134] sm:$0xf] %v1006
      %1151 = vst [vmem:[#allocation2 + $0x138] sm:$0xf] %v1007
      %1152 = vst [vmem:[#allocation2 + $0x13c] sm:$0xf] %v1008
      %1153 = vst [vmem:[#allocation2 + $0x140] sm:$0xf] %v1009
      %1154 = vst [vmem:[#allocation2 + $0x144] sm:$0xf] %v1010
      %1155 = vst [vmem:[#allocation2 + $0x148] sm:$0xf] %v1011
      %1156 = vst [vmem:[#allocation2 + $0x14c] sm:$0xf] %v1012
      %1157 = vst [vmem:[#allocation2 + $0x150] sm:$0xf] %v1013
      %1158 = vst [vmem:[#allocation2 + $0x154] sm:$0xf] %v1014
      %1159 = vst [vmem:[#allocation2 + $0x158] sm:$0xf] %v1015
      %1160 = vst [vmem:[#allocation2 + $0x15c] sm:$0xf] %v1016
      %1161 = vst [vmem:[#allocation2 + $0x160] sm:$0xf] %v1017
      %1162 = vst [vmem:[#allocation2 + $0x164] sm:$0xf] %v1018
      %1163 = vst [vmem:[#allocation2 + $0x168] sm:$0xf] %v1019
      %1164 = vst [vmem:[#allocation2 + $0x16c] sm:$0xf] %v1020
      %1165 = vst [vmem:[#allocation2 + $0x170] sm:$0xf] %v1021
      %1166 = vst [vmem:[#allocation2 + $0x174] sm:$0xf] %v1022
      %1167 = vst [vmem:[#allocation2 + $0x178] sm:$0xf] %v1023
      %1168 = vst [vmem:[#allocation2 + $0x17c] sm:$0xf] %v1024
      %1169 = vst [vmem:[#allocation2 + $0x180] sm:$0xf] %v1025
      %1170 = vst [vmem:[#allocation2 + $0x184] sm:$0xf] %v1026
      %1171 = vst [vmem:[#allocation2 + $0x188] sm:$0xf] %v1027
      %1172 = vst [vmem:[#allocation2 + $0x18c] sm:$0xf] %v1028
      %1173 = vst [vmem:[#allocation2 + $0x190] sm:$0xf] %v1029
      %1174 = vst [vmem:[#allocation2 + $0x194] sm:$0xf] %v1030
      %1175 = vst [vmem:[#allocation2 + $0x198] sm:$0xf] %v1031
      %1176 = vst [vmem:[#allocation2 + $0x19c] sm:$0xf] %v1032
      %1177 = vst [vmem:[#allocation2 + $0x1a0] sm:$0xf] %v1033
      %1178 = vst [vmem:[#allocation2 + $0x1a4] sm:$0xf] %v1034
      %1179 = vst [vmem:[#allocation2 + $0x1a8] sm:$0xf] %v1035
      %1180 = vst [vmem:[#allocation2 + $0x1ac] sm:$0xf] %v1036
      %1181 = vst [vmem:[#allocation2 + $0x1b0] sm:$0xf] %v1037
      %1182 = vst [vmem:[#allocation2 + $0x1b4] sm:$0xf] %v1038
      %1183 = vst [vmem:[#allocation2 + $0x1b8] sm:$0xf] %v1039
      %1184 = vst [vmem:[#allocation2 + $0x1bc] sm:$0xf] %v1040
      %1185 = vst [vmem:[#allocation2 + $0x1c0] sm:$0xf] %v1041
      %1186 = vst [vmem:[#allocation2 + $0x1c4] sm:$0xf] %v1042
      %1187 = vst [vmem:[#allocation2 + $0x1c8] sm:$0xf] %v1043
      %1188 = vst [vmem:[#allocation2 + $0x1cc] sm:$0xf] %v1044
      %1189 = vst [vmem:[#allocation2 + $0x1d0] sm:$0xf] %v1045
      %1190 = vst [vmem:[#allocation2 + $0x1d4] sm:$0xf] %v1046
      %1191 = vst [vmem:[#allocation2 + $0x1d8] sm:$0xf] %v1047
      %1192 = vst [vmem:[#allocation2 + $0x1dc] sm:$0xf] %v1048
      %1193 = vst [vmem:[#allocation2 + $0x1e0] sm:$0xf] %v1049
      %1194 = vst [vmem:[#allocation2 + $0x1e4] sm:$0xf] %v1050
      %1195 = vst [vmem:[#allocation2 + $0x1e8] sm:$0xf] %v1051
      %1196 = vst [vmem:[#allocation2 + $0x1ec] sm:$0xf] %v1052
      %1197 = vst [vmem:[#allocation2 + $0x1f0] sm:$0xf] %v1053
      %1198 = vst [vmem:[#allocation2 + $0x1f4] sm:$0xf] %v1054
      %1199 = vst [vmem:[#allocation2 + $0x1f8] sm:$0xf] %v1055
      %1200 = vst [vmem:[#allocation2 + $0x1fc] sm:$0xf] %v1056
      %1201 = vst [vmem:[#allocation2 + $0x200] sm:$0xf] %v1057
      %1202 = vst [vmem:[#allocation2 + $0x204] sm:$0xf] %v1058
      %1203 = vst [vmem:[#allocation2 + $0x208] sm:$0xf] %v1059
      %1204 = vst [vmem:[#allocation2 + $0x20c] sm:$0xf] %v1060
      %1205 = vst [vmem:[#allocation2 + $0x210] sm:$0xf] %v1061
      %1206 = vst [vmem:[#allocation2 + $0x214] sm:$0xf] %v1062
      %1207 = vst [vmem:[#allocation2 + $0x218] sm:$0xf] %v1063
      %1208 = vst [vmem:[#allocation2 + $0x21c] sm:$0xf] %v1064
      %1209 = vst [vmem:[#allocation2 + $0x220] sm:$0xf] %v1065
      %1210 = vst [vmem:[#allocation2 + $0x224] sm:$0xf] %v1066
      %1211 = vst [vmem:[#allocation2 + $0x228] sm:$0xf] %v1067
      %1212 = vst [vmem:[#allocation2 + $0x22c] sm:$0xf] %v1068
      %1213 = vst [vmem:[#allocation2 + $0x230] sm:$0xf] %v1069
      %1214 = vst [vmem:[#allocation2 + $0x234] sm:$0xf] %v1070
      %1215 = vst [vmem:[#allocation2 + $0x238] sm:$0xf] %v1071
      %1216 = vst [vmem:[#allocation2 + $0x23c] sm:$0xf] %v1072
      %1217 = vst [vmem:[#allocation3] sm:$0x1] 0.0
    $region21: #{tpu_custom_call.1} parent=1 // pred_fallthru
      _
    %v1218 = vld [vmem:[#allocation4] sm:$0xff]
    %v1219 = vld [vmem:[#allocation4 + $0x8] sm:$0x1]
    %v1220 = vld [vmem:[#allocation7] sm:$0xff]
    %v1221 = vld [vmem:[#allocation7 + $0x8] sm:$0x1]
    %v1222 = vmul.f32 %v1218, %v1220
    %v1223 = vmul.f32 %v1219, %v1221
    %v1226 = vperm.slane %v1222, 0
    %v1227 = vperm.slane %v1222, 1
    %v1228 = vperm.slane %v1222, 2
    %v1229 = vperm.slane %v1222, 3
    %v1230 = vperm.slane %v1222, 4
    %v1231 = vperm.slane %v1222, 5
    %v1232 = vperm.slane %v1222, 6
    %v1233 = vperm.slane %v1222, 7
    %v1234 = vperm.slane %v1223, 0
    %v1244 = vpack.c.bf16 %v1227, %v1226
    %v1245 = vpack.c.bf16 %v1229, %v1228
    %v1246 = vpack.c.bf16 %v1231, %v1230
    %v1247 = vpack.c.bf16 %v1233, %v1232
    %v1248 = vpack.c.bf16 %v1234, %v1234
    %v1249 = vunpack.c.l.bf16 %v1244
    %v1250 = vunpack.c.h.bf16 %v1244
    %v1251 = vunpack.c.l.bf16 %v1245
    %v1252 = vunpack.c.h.bf16 %v1245
    %v1253 = vunpack.c.l.bf16 %v1246
    %v1254 = vunpack.c.h.bf16 %v1246
    %v1255 = vunpack.c.l.bf16 %v1247
    %v1256 = vunpack.c.h.bf16 %v1247
    %v1257 = vunpack.c.l.bf16 %v1248
    %v1266 = vrot.slane %v1250, 7
    %v1267 = vrot.slane %v1251, 6
    %v1268 = vrot.slane %v1252, 5
    %v1269 = vrot.slane %v1253, 4
    %v1270 = vrot.slane %v1254, 3
    %v1271 = vrot.slane %v1255, 2
    %v1272 = vrot.slane %v1256, 1
    %vm1273 = vcmask 1040384
    %v1274 = vsel %vm1273, %v1249, %v1266
    %vm1275 = vcmask 1042434
    %v1276 = vsel %vm1275, %v1267, %v1268
    %vm1277 = vcmask 1041408
    %v1278 = vsel %vm1277, %v1274, %v1276
    %vm1279 = vcmask 1044484
    %v1280 = vsel %vm1279, %v1269, %v1270
    %vm1281 = vcmask 1046534
    %v1282 = vsel %vm1281, %v1271, %v1272
    %vm1283 = vcmask 1045508
    %v1284 = vsel %vm1283, %v1280, %v1282
    %vm1285 = vcmask 1043456
    %v1286 = vsel %vm1285, %v1278, %v1284
    %v1288 = vsub.f32 %v1222, %v1286
    %v1289 = vsub.f32 %v1223, %v1257
    %v1292 = vperm.slane %v1288, 0
    %v1293 = vperm.slane %v1288, 1
    %v1294 = vperm.slane %v1288, 2
    %v1295 = vperm.slane %v1288, 3
    %v1296 = vperm.slane %v1288, 4
    %v1297 = vperm.slane %v1288, 5
    %v1298 = vperm.slane %v1288, 6
    %v1299 = vperm.slane %v1288, 7
    %v1300 = vperm.slane %v1289, 0
    %v1310 = vpack.c.bf16 %v1292, %v1292
    %v1311 = vpack.c.bf16 %v1293, %v1293
    %v1312 = vpack.c.bf16 %v1294, %v1294
    %v1313 = vpack.c.bf16 %v1295, %v1295
    %v1314 = vpack.c.bf16 %v1296, %v1296
    %v1315 = vpack.c.bf16 %v1297, %v1297
    %v1316 = vpack.c.bf16 %v1298, %v1298
    %v1317 = vpack.c.bf16 %v1299, %v1299
    %v1318 = vpack.c.bf16 %v1300, %v1300
    %v1319 = vld [vmem:[#allocation2] sm:$0xf]
    %v1320 = vld [vmem:[#allocation2 + $0x4] sm:$0xf]
    %v1321 = vld [vmem:[#allocation2 + $0x8] sm:$0xf]
    %v1322 = vld [vmem:[#allocation2 + $0xc] sm:$0xf]
    %v1323 = vld [vmem:[#allocation2 + $0x10] sm:$0xf]
    %v1324 = vld [vmem:[#allocation2 + $0x14] sm:$0xf]
    %v1325 = vld [vmem:[#allocation2 + $0x18] sm:$0xf]
    %v1326 = vld [vmem:[#allocation2 + $0x1c] sm:$0xf]
    %v1327 = vld [vmem:[#allocation2 + $0x20] sm:$0xf]
    %v1328 = vld [vmem:[#allocation2 + $0x24] sm:$0xf]
    %v1329 = vld [vmem:[#allocation2 + $0x28] sm:$0xf]
    %v1330 = vld [vmem:[#allocation2 + $0x2c] sm:$0xf]
    %v1331 = vld [vmem:[#allocation2 + $0x30] sm:$0xf]
    %v1332 = vld [vmem:[#allocation2 + $0x34] sm:$0xf]
    %v1333 = vld [vmem:[#allocation2 + $0x38] sm:$0xf]
    %v1334 = vld [vmem:[#allocation2 + $0x3c] sm:$0xf]
    %v1335 = vld [vmem:[#allocation2 + $0x40] sm:$0xf]
    %v1336 = vld [vmem:[#allocation2 + $0x44] sm:$0xf]
    %v1337 = vld [vmem:[#allocation2 + $0x48] sm:$0xf]
    %v1338 = vld [vmem:[#allocation2 + $0x4c] sm:$0xf]
    %v1339 = vld [vmem:[#allocation2 + $0x50] sm:$0xf]
    %v1340 = vld [vmem:[#allocation2 + $0x54] sm:$0xf]
    %v1341 = vld [vmem:[#allocation2 + $0x58] sm:$0xf]
    %v1342 = vld [vmem:[#allocation2 + $0x5c] sm:$0xf]
    %v1343 = vld [vmem:[#allocation2 + $0x60] sm:$0xf]
    %v1344 = vld [vmem:[#allocation2 + $0x64] sm:$0xf]
    %v1345 = vld [vmem:[#allocation2 + $0x68] sm:$0xf]
    %v1346 = vld [vmem:[#allocation2 + $0x6c] sm:$0xf]
    %v1347 = vld [vmem:[#allocation2 + $0x70] sm:$0xf]
    %v1348 = vld [vmem:[#allocation2 + $0x74] sm:$0xf]
    %v1349 = vld [vmem:[#allocation2 + $0x78] sm:$0xf]
    %v1350 = vld [vmem:[#allocation2 + $0x7c] sm:$0xf]
    %v1351 = vld [vmem:[#allocation2 + $0x80] sm:$0xf]
    %v1352 = vld [vmem:[#allocation2 + $0x84] sm:$0xf]
    %v1353 = vld [vmem:[#allocation2 + $0x88] sm:$0xf]
    %v1354 = vld [vmem:[#allocation2 + $0x8c] sm:$0xf]
    %v1355 = vld [vmem:[#allocation2 + $0x90] sm:$0xf]
    %v1356 = vld [vmem:[#allocation2 + $0x94] sm:$0xf]
    %v1357 = vld [vmem:[#allocation2 + $0x98] sm:$0xf]
    %v1358 = vld [vmem:[#allocation2 + $0x9c] sm:$0xf]
    %v1359 = vld [vmem:[#allocation2 + $0xa0] sm:$0xf]
    %v1360 = vld [vmem:[#allocation2 + $0xa4] sm:$0xf]
    %v1361 = vld [vmem:[#allocation2 + $0xa8] sm:$0xf]
    %v1362 = vld [vmem:[#allocation2 + $0xac] sm:$0xf]
    %v1363 = vld [vmem:[#allocation2 + $0xb0] sm:$0xf]
    %v1364 = vld [vmem:[#allocation2 + $0xb4] sm:$0xf]
    %v1365 = vld [vmem:[#allocation2 + $0xb8] sm:$0xf]
    %v1366 = vld [vmem:[#allocation2 + $0xbc] sm:$0xf]
    %v1367 = vld [vmem:[#allocation2 + $0xc0] sm:$0xf]
    %v1368 = vld [vmem:[#allocation2 + $0xc4] sm:$0xf]
    %v1369 = vld [vmem:[#allocation2 + $0xc8] sm:$0xf]
    %v1370 = vld [vmem:[#allocation2 + $0xcc] sm:$0xf]
    %v1371 = vld [vmem:[#allocation2 + $0xd0] sm:$0xf]
    %v1372 = vld [vmem:[#allocation2 + $0xd4] sm:$0xf]
    %v1373 = vld [vmem:[#allocation2 + $0xd8] sm:$0xf]
    %v1374 = vld [vmem:[#allocation2 + $0xdc] sm:$0xf]
    %v1375 = vld [vmem:[#allocation2 + $0xe0] sm:$0xf]
    %v1376 = vld [vmem:[#allocation2 + $0xe4] sm:$0xf]
    %v1377 = vld [vmem:[#allocation2 + $0xe8] sm:$0xf]
    %v1378 = vld [vmem:[#allocation2 + $0xec] sm:$0xf]
    %v1379 = vld [vmem:[#allocation2 + $0xf0] sm:$0xf]
    %v1380 = vld [vmem:[#allocation2 + $0xf4] sm:$0xf]
    %v1381 = vld [vmem:[#allocation2 + $0xf8] sm:$0xf]
    %v1382 = vld [vmem:[#allocation2 + $0xfc] sm:$0xf]
    %v1383 = vld [vmem:[#allocation2 + $0x100] sm:$0xf]
    %v1384 = vld [vmem:[#allocation2 + $0x104] sm:$0xf]
    %v1385 = vld [vmem:[#allocation2 + $0x108] sm:$0xf]
    %v1386 = vld [vmem:[#allocation2 + $0x10c] sm:$0xf]
    %v1387 = vld [vmem:[#allocation2 + $0x110] sm:$0xf]
    %v1388 = vld [vmem:[#allocation2 + $0x114] sm:$0xf]
    %v1389 = vld [vmem:[#allocation2 + $0x118] sm:$0xf]
    %v1390 = vld [vmem:[#allocation2 + $0x11c] sm:$0xf]
    %v1391 = vld [vmem:[#allocation2 + $0x120] sm:$0xf]
    %v1392 = vld [vmem:[#allocation2 + $0x124] sm:$0xf]
    %v1393 = vld [vmem:[#allocation2 + $0x128] sm:$0xf]
    %v1394 = vld [vmem:[#allocation2 + $0x12c] sm:$0xf]
    %v1395 = vld [vmem:[#allocation2 + $0x130] sm:$0xf]
    %v1396 = vld [vmem:[#allocation2 + $0x134] sm:$0xf]
    %v1397 = vld [vmem:[#allocation2 + $0x138] sm:$0xf]
    %v1398 = vld [vmem:[#allocation2 + $0x13c] sm:$0xf]
    %v1399 = vld [vmem:[#allocation2 + $0x140] sm:$0xf]
    %v1400 = vld [vmem:[#allocation2 + $0x144] sm:$0xf]
    %v1401 = vld [vmem:[#allocation2 + $0x148] sm:$0xf]
    %v1402 = vld [vmem:[#allocation2 + $0x14c] sm:$0xf]
    %v1403 = vld [vmem:[#allocation2 + $0x150] sm:$0xf]
    %v1404 = vld [vmem:[#allocation2 + $0x154] sm:$0xf]
    %v1405 = vld [vmem:[#allocation2 + $0x158] sm:$0xf]
    %v1406 = vld [vmem:[#allocation2 + $0x15c] sm:$0xf]
    %v1407 = vld [vmem:[#allocation2 + $0x160] sm:$0xf]
    %v1408 = vld [vmem:[#allocation2 + $0x164] sm:$0xf]
    %v1409 = vld [vmem:[#allocation2 + $0x168] sm:$0xf]
    %v1410 = vld [vmem:[#allocation2 + $0x16c] sm:$0xf]
    %v1411 = vld [vmem:[#allocation2 + $0x170] sm:$0xf]
    %v1412 = vld [vmem:[#allocation2 + $0x174] sm:$0xf]
    %v1413 = vld [vmem:[#allocation2 + $0x178] sm:$0xf]
    %v1414 = vld [vmem:[#allocation2 + $0x17c] sm:$0xf]
    %v1415 = vld [vmem:[#allocation2 + $0x180] sm:$0xf]
    %v1416 = vld [vmem:[#allocation2 + $0x184] sm:$0xf]
    %v1417 = vld [vmem:[#allocation2 + $0x188] sm:$0xf]
    %v1418 = vld [vmem:[#allocation2 + $0x18c] sm:$0xf]
    %v1419 = vld [vmem:[#allocation2 + $0x190] sm:$0xf]
    %v1420 = vld [vmem:[#allocation2 + $0x194] sm:$0xf]
    %v1421 = vld [vmem:[#allocation2 + $0x198] sm:$0xf]
    %v1422 = vld [vmem:[#allocation2 + $0x19c] sm:$0xf]
    %v1423 = vld [vmem:[#allocation2 + $0x1a0] sm:$0xf]
    %v1424 = vld [vmem:[#allocation2 + $0x1a4] sm:$0xf]
    %v1425 = vld [vmem:[#allocation2 + $0x1a8] sm:$0xf]
    %v1426 = vld [vmem:[#allocation2 + $0x1ac] sm:$0xf]
    %v1427 = vld [vmem:[#allocation2 + $0x1b0] sm:$0xf]
    %v1428 = vld [vmem:[#allocation2 + $0x1b4] sm:$0xf]
    %v1429 = vld [vmem:[#allocation2 + $0x1b8] sm:$0xf]
    %v1430 = vld [vmem:[#allocation2 + $0x1bc] sm:$0xf]
    %v1431 = vld [vmem:[#allocation2 + $0x1c0] sm:$0xf]
    %v1432 = vld [vmem:[#allocation2 + $0x1c4] sm:$0xf]
    %v1433 = vld [vmem:[#allocation2 + $0x1c8] sm:$0xf]
    %v1434 = vld [vmem:[#allocation2 + $0x1cc] sm:$0xf]
    %v1435 = vld [vmem:[#allocation2 + $0x1d0] sm:$0xf]
    %v1436 = vld [vmem:[#allocation2 + $0x1d4] sm:$0xf]
    %v1437 = vld [vmem:[#allocation2 + $0x1d8] sm:$0xf]
    %v1438 = vld [vmem:[#allocation2 + $0x1dc] sm:$0xf]
    %v1439 = vld [vmem:[#allocation2 + $0x1e0] sm:$0xf]
    %v1440 = vld [vmem:[#allocation2 + $0x1e4] sm:$0xf]
    %v1441 = vld [vmem:[#allocation2 + $0x1e8] sm:$0xf]
    %v1442 = vld [vmem:[#allocation2 + $0x1ec] sm:$0xf]
    %v1443 = vld [vmem:[#allocation2 + $0x1f0] sm:$0xf]
    %v1444 = vld [vmem:[#allocation2 + $0x1f4] sm:$0xf]
    %v1445 = vld [vmem:[#allocation2 + $0x1f8] sm:$0xf]
    %v1446 = vld [vmem:[#allocation2 + $0x1fc] sm:$0xf]
    %v1447 = vld [vmem:[#allocation2 + $0x200] sm:$0xf]
    %v1448 = vld [vmem:[#allocation2 + $0x204] sm:$0xf]
    %v1449 = vld [vmem:[#allocation2 + $0x208] sm:$0xf]
    %v1450 = vld [vmem:[#allocation2 + $0x20c] sm:$0xf]
    %v1451 = vld [vmem:[#allocation2 + $0x210] sm:$0xf]
    %v1452 = vld [vmem:[#allocation2 + $0x214] sm:$0xf]
    %v1453 = vld [vmem:[#allocation2 + $0x218] sm:$0xf]
    %v1454 = vld [vmem:[#allocation2 + $0x21c] sm:$0xf]
    %v1455 = vld [vmem:[#allocation2 + $0x220] sm:$0xf]
    %v1456 = vld [vmem:[#allocation2 + $0x224] sm:$0xf]
    %v1457 = vld [vmem:[#allocation2 + $0x228] sm:$0xf]
    %v1458 = vld [vmem:[#allocation2 + $0x22c] sm:$0xf]
    %v1459 = vld [vmem:[#allocation2 + $0x230] sm:$0xf]
    %v1460 = vld [vmem:[#allocation2 + $0x234] sm:$0xf]
    %v1461 = vld [vmem:[#allocation2 + $0x238] sm:$0xf]
    %v1462 = vld [vmem:[#allocation2 + $0x23c] sm:$0xf]
    %v1607 = vunpack.c.l.b16 %v1319
    %v1608 = vunpack.c.l.b16 %v1320
    %v1609 = vunpack.c.l.b16 %v1321
    %v1610 = vunpack.c.l.b16 %v1322
    %v1611 = vunpack.c.l.b16 %v1323
    %v1612 = vunpack.c.l.b16 %v1324
    %v1613 = vunpack.c.l.b16 %v1325
    %v1614 = vunpack.c.l.b16 %v1326
    %v1615 = vunpack.c.l.b16 %v1327
    %v1616 = vunpack.c.l.b16 %v1328
    %v1617 = vunpack.c.l.b16 %v1329
    %v1618 = vunpack.c.l.b16 %v1330
    %v1619 = vunpack.c.l.b16 %v1331
    %v1620 = vunpack.c.l.b16 %v1332
    %v1621 = vunpack.c.l.b16 %v1333
    %v1622 = vunpack.c.l.b16 %v1334
    %v1623 = vunpack.c.l.b16 %v1335
    %v1624 = vunpack.c.l.b16 %v1336
    %v1625 = vunpack.c.l.b16 %v1337
    %v1626 = vunpack.c.l.b16 %v1338
    %v1627 = vunpack.c.l.b16 %v1339
    %v1628 = vunpack.c.l.b16 %v1340
    %v1629 = vunpack.c.l.b16 %v1341
    %v1630 = vunpack.c.l.b16 %v1342
    %v1631 = vunpack.c.l.b16 %v1343
    %v1632 = vunpack.c.l.b16 %v1344
    %v1633 = vunpack.c.l.b16 %v1345
    %v1634 = vunpack.c.l.b16 %v1346
    %v1635 = vunpack.c.l.b16 %v1347
    %v1636 = vunpack.c.l.b16 %v1348
    %v1637 = vunpack.c.l.b16 %v1349
    %v1638 = vunpack.c.l.b16 %v1350
    %v1639 = vunpack.c.l.b16 %v1351
    %v1640 = vunpack.c.l.b16 %v1352
    %v1641 = vunpack.c.l.b16 %v1353
    %v1642 = vunpack.c.l.b16 %v1354
    %v1643 = vunpack.c.l.b16 %v1355
    %v1644 = vunpack.c.l.b16 %v1356
    %v1645 = vunpack.c.l.b16 %v1357
    %v1646 = vunpack.c.l.b16 %v1358
    %v1647 = vunpack.c.l.b16 %v1359
    %v1648 = vunpack.c.l.b16 %v1360
    %v1649 = vunpack.c.l.b16 %v1361
    %v1650 = vunpack.c.l.b16 %v1362
    %v1651 = vunpack.c.l.b16 %v1363
    %v1652 = vunpack.c.l.b16 %v1364
    %v1653 = vunpack.c.l.b16 %v1365
    %v1654 = vunpack.c.l.b16 %v1366
    %v1655 = vunpack.c.l.b16 %v1367
    %v1656 = vunpack.c.l.b16 %v1368
    %v1657 = vunpack.c.l.b16 %v1369
    %v1658 = vunpack.c.l.b16 %v1370
    %v1659 = vunpack.c.l.b16 %v1371
    %v1660 = vunpack.c.l.b16 %v1372
    %v1661 = vunpack.c.l.b16 %v1373
    %v1662 = vunpack.c.l.b16 %v1374
    %v1663 = vunpack.c.l.b16 %v1375
    %v1664 = vunpack.c.l.b16 %v1376
    %v1665 = vunpack.c.l.b16 %v1377
    %v1666 = vunpack.c.l.b16 %v1378
    %v1667 = vunpack.c.l.b16 %v1379
    %v1668 = vunpack.c.l.b16 %v1380
    %v1669 = vunpack.c.l.b16 %v1381
    %v1670 = vunpack.c.l.b16 %v1382
    %v1671 = vunpack.c.l.b16 %v1383
    %v1672 = vunpack.c.l.b16 %v1384
    %v1673 = vunpack.c.l.b16 %v1385
    %v1674 = vunpack.c.l.b16 %v1386
    %v1675 = vunpack.c.l.b16 %v1387
    %v1676 = vunpack.c.l.b16 %v1388
    %v1677 = vunpack.c.l.b16 %v1389
    %v1678 = vunpack.c.l.b16 %v1390
    %v1679 = vunpack.c.l.b16 %v1391
    %v1680 = vunpack.c.l.b16 %v1392
    %v1681 = vunpack.c.l.b16 %v1393
    %v1682 = vunpack.c.l.b16 %v1394
    %v1683 = vunpack.c.l.b16 %v1395
    %v1684 = vunpack.c.l.b16 %v1396
    %v1685 = vunpack.c.l.b16 %v1397
    %v1686 = vunpack.c.l.b16 %v1398
    %v1687 = vunpack.c.l.b16 %v1399
    %v1688 = vunpack.c.l.b16 %v1400
    %v1689 = vunpack.c.l.b16 %v1401
    %v1690 = vunpack.c.l.b16 %v1402
    %v1691 = vunpack.c.l.b16 %v1403
    %v1692 = vunpack.c.l.b16 %v1404
    %v1693 = vunpack.c.l.b16 %v1405
    %v1694 = vunpack.c.l.b16 %v1406
    %v1695 = vunpack.c.l.b16 %v1407
    %v1696 = vunpack.c.l.b16 %v1408
    %v1697 = vunpack.c.l.b16 %v1409
    %v1698 = vunpack.c.l.b16 %v1410
    %v1699 = vunpack.c.l.b16 %v1411
    %v1700 = vunpack.c.l.b16 %v1412
    %v1701 = vunpack.c.l.b16 %v1413
    %v1702 = vunpack.c.l.b16 %v1414
    %v1703 = vunpack.c.l.b16 %v1415
    %v1704 = vunpack.c.l.b16 %v1416
    %v1705 = vunpack.c.l.b16 %v1417
    %v1706 = vunpack.c.l.b16 %v1418
    %v1707 = vunpack.c.l.b16 %v1419
    %v1708 = vunpack.c.l.b16 %v1420
    %v1709 = vunpack.c.l.b16 %v1421
    %v1710 = vunpack.c.l.b16 %v1422
    %v1711 = vunpack.c.l.b16 %v1423
    %v1712 = vunpack.c.l.b16 %v1424
    %v1713 = vunpack.c.l.b16 %v1425
    %v1714 = vunpack.c.l.b16 %v1426
    %v1715 = vunpack.c.l.b16 %v1427
    %v1716 = vunpack.c.l.b16 %v1428
    %v1717 = vunpack.c.l.b16 %v1429
    %v1718 = vunpack.c.l.b16 %v1430
    %v1719 = vunpack.c.l.b16 %v1431
    %v1720 = vunpack.c.l.b16 %v1432
    %v1721 = vunpack.c.l.b16 %v1433
    %v1722 = vunpack.c.l.b16 %v1434
    %v1723 = vunpack.c.l.b16 %v1435
    %v1724 = vunpack.c.l.b16 %v1436
    %v1725 = vunpack.c.l.b16 %v1437
    %v1726 = vunpack.c.l.b16 %v1438
    %v1727 = vunpack.c.l.b16 %v1439
    %v1728 = vunpack.c.l.b16 %v1440
    %v1729 = vunpack.c.l.b16 %v1441
    %v1730 = vunpack.c.l.b16 %v1442
    %v1731 = vunpack.c.l.b16 %v1443
    %v1732 = vunpack.c.l.b16 %v1444
    %v1733 = vunpack.c.l.b16 %v1445
    %v1734 = vunpack.c.l.b16 %v1446
    %v1735 = vunpack.c.l.b16 %v1447
    %v1736 = vunpack.c.l.b16 %v1448
    %v1737 = vunpack.c.l.b16 %v1449
    %v1738 = vunpack.c.l.b16 %v1450
    %v1739 = vunpack.c.l.b16 %v1451
    %v1740 = vunpack.c.l.b16 %v1452
    %v1741 = vunpack.c.l.b16 %v1453
    %v1742 = vunpack.c.l.b16 %v1454
    %v1743 = vunpack.c.l.b16 %v1455
    %v1744 = vunpack.c.l.b16 %v1456
    %v1745 = vunpack.c.l.b16 %v1457
    %v1746 = vunpack.c.l.b16 %v1458
    %v1747 = vunpack.c.l.b16 %v1459
    %v1748 = vunpack.c.l.b16 %v1460
    %v1749 = vunpack.c.l.b16 %v1461
    %v1750 = vunpack.c.l.b16 %v1462
    %v1751 = vpack.c.b16 %v1608, %v1607
    %v1752 = vpack.c.b16 %v1610, %v1609
    %v1753 = vpack.c.b16 %v1612, %v1611
    %v1754 = vpack.c.b16 %v1614, %v1613
    %v1755 = vpack.c.b16 %v1616, %v1615
    %v1756 = vpack.c.b16 %v1618, %v1617
    %v1757 = vpack.c.b16 %v1620, %v1619
    %v1758 = vpack.c.b16 %v1622, %v1621
    %v1759 = vpack.c.b16 %v1624, %v1623
    %v1760 = vpack.c.b16 %v1626, %v1625
    %v1761 = vpack.c.b16 %v1628, %v1627
    %v1762 = vpack.c.b16 %v1630, %v1629
    %v1763 = vpack.c.b16 %v1632, %v1631
    %v1764 = vpack.c.b16 %v1634, %v1633
    %v1765 = vpack.c.b16 %v1636, %v1635
    %v1766 = vpack.c.b16 %v1638, %v1637
    %v1767 = vpack.c.b16 %v1640, %v1639
    %v1768 = vpack.c.b16 %v1642, %v1641
    %v1769 = vpack.c.b16 %v1644, %v1643
    %v1770 = vpack.c.b16 %v1646, %v1645
    %v1771 = vpack.c.b16 %v1648, %v1647
    %v1772 = vpack.c.b16 %v1650, %v1649
    %v1773 = vpack.c.b16 %v1652, %v1651
    %v1774 = vpack.c.b16 %v1654, %v1653
    %v1775 = vpack.c.b16 %v1656, %v1655
    %v1776 = vpack.c.b16 %v1658, %v1657
    %v1777 = vpack.c.b16 %v1660, %v1659
    %v1778 = vpack.c.b16 %v1662, %v1661
    %v1779 = vpack.c.b16 %v1664, %v1663
    %v1780 = vpack.c.b16 %v1666, %v1665
    %v1781 = vpack.c.b16 %v1668, %v1667
    %v1782 = vpack.c.b16 %v1670, %v1669
    %v1783 = vpack.c.b16 %v1672, %v1671
    %v1784 = vpack.c.b16 %v1674, %v1673
    %v1785 = vpack.c.b16 %v1676, %v1675
    %v1786 = vpack.c.b16 %v1678, %v1677
    %v1787 = vpack.c.b16 %v1680, %v1679
    %v1788 = vpack.c.b16 %v1682, %v1681
    %v1789 = vpack.c.b16 %v1684, %v1683
    %v1790 = vpack.c.b16 %v1686, %v1685
    %v1791 = vpack.c.b16 %v1688, %v1687
    %v1792 = vpack.c.b16 %v1690, %v1689
    %v1793 = vpack.c.b16 %v1692, %v1691
    %v1794 = vpack.c.b16 %v1694, %v1693
    %v1795 = vpack.c.b16 %v1696, %v1695
    %v1796 = vpack.c.b16 %v1698, %v1697
    %v1797 = vpack.c.b16 %v1700, %v1699
    %v1798 = vpack.c.b16 %v1702, %v1701
    %v1799 = vpack.c.b16 %v1704, %v1703
    %v1800 = vpack.c.b16 %v1706, %v1705
    %v1801 = vpack.c.b16 %v1708, %v1707
    %v1802 = vpack.c.b16 %v1710, %v1709
    %v1803 = vpack.c.b16 %v1712, %v1711
    %v1804 = vpack.c.b16 %v1714, %v1713
    %v1805 = vpack.c.b16 %v1716, %v1715
    %v1806 = vpack.c.b16 %v1718, %v1717
    %v1807 = vpack.c.b16 %v1720, %v1719
    %v1808 = vpack.c.b16 %v1722, %v1721
    %v1809 = vpack.c.b16 %v1724, %v1723
    %v1810 = vpack.c.b16 %v1726, %v1725
    %v1811 = vpack.c.b16 %v1728, %v1727
    %v1812 = vpack.c.b16 %v1730, %v1729
    %v1813 = vpack.c.b16 %v1732, %v1731
    %v1814 = vpack.c.b16 %v1734, %v1733
    %v1815 = vpack.c.b16 %v1736, %v1735
    %v1816 = vpack.c.b16 %v1738, %v1737
    %v1817 = vpack.c.b16 %v1740, %v1739
    %v1818 = vpack.c.b16 %v1742, %v1741
    %v1819 = vpack.c.b16 %v1744, %v1743
    %v1820 = vpack.c.b16 %v1746, %v1745
    %v1821 = vpack.c.b16 %v1748, %v1747
    %v1822 = vpack.c.b16 %v1750, %v1749
    %1895 = vmatpush.bf16.msra.mxu0 %v1758
    %1896 = vmatpush.bf16.msra.mxu0 %v1757
    %1897 = vmatpush.bf16.msra.mxu0 %v1756
    %1898 = vmatpush.bf16.msra.mxu0 %v1755
    %1899 = vmatpush.bf16.msra.mxu0 %v1754
    %1900 = vmatpush.bf16.msra.mxu0 %v1753
    %1901 = vmatpush.bf16.msra.mxu0 %v1752
    %1902 = vmatpush.bf16.msra.mxu0 %v1751
    %1903 = vmatmul.bf16.gmra.mxu0 %v1310
    %v1904 = vpop.f32.mrf.mxu0
    %v1905 = vadd.f32 0.0, %v1904
    %v1906 = vpop.f32.mrf.mxu0
    %1907 = vdwg.mxu0
    %1908 = vmatpush.bf16.msra.mxu0 %v1766
    %1909 = vmatpush.bf16.msra.mxu0 %v1765
    %1910 = vmatpush.bf16.msra.mxu0 %v1764
    %1911 = vmatpush.bf16.msra.mxu0 %v1763
    %1912 = vmatpush.bf16.msra.mxu0 %v1762
    %1913 = vmatpush.bf16.msra.mxu0 %v1761
    %1914 = vmatpush.bf16.msra.mxu0 %v1760
    %1915 = vmatpush.bf16.msra.mxu0 %v1759
    %1916 = vmatmul.bf16.gmra.mxu0 %v1311
    %v1917 = vpop.f32.mrf.mxu0
    %v1918 = vadd.f32 %v1905, %v1917
    %v1919 = vpop.f32.mrf.mxu0
    %1920 = vdwg.mxu0
    %1921 = vmatpush.bf16.msra.mxu0 %v1774
    %1922 = vmatpush.bf16.msra.mxu0 %v1773
    %1923 = vmatpush.bf16.msra.mxu0 %v1772
    %1924 = vmatpush.bf16.msra.mxu0 %v1771
    %1925 = vmatpush.bf16.msra.mxu0 %v1770
    %1926 = vmatpush.bf16.msra.mxu0 %v1769
    %1927 = vmatpush.bf16.msra.mxu0 %v1768
    %1928 = vmatpush.bf16.msra.mxu0 %v1767
    %1929 = vmatmul.bf16.gmra.mxu0 %v1312
    %v1930 = vpop.f32.mrf.mxu0
    %v1931 = vadd.f32 %v1918, %v1930
    %v1932 = vpop.f32.mrf.mxu0
    %1933 = vdwg.mxu0
    %1934 = vmatpush.bf16.msra.mxu0 %v1782
    %1935 = vmatpush.bf16.msra.mxu0 %v1781
    %1936 = vmatpush.bf16.msra.mxu0 %v1780
    %1937 = vmatpush.bf16.msra.mxu0 %v1779
    %1938 = vmatpush.bf16.msra.mxu0 %v1778
    %1939 = vmatpush.bf16.msra.mxu0 %v1777
    %1940 = vmatpush.bf16.msra.mxu0 %v1776
    %1941 = vmatpush.bf16.msra.mxu0 %v1775
    %1942 = vmatmul.bf16.gmra.mxu0 %v1313
    %v1943 = vpop.f32.mrf.mxu0
    %v1944 = vadd.f32 %v1931, %v1943
    %v1945 = vpop.f32.mrf.mxu0
    %1946 = vdwg.mxu0
    %1947 = vmatpush.bf16.msra.mxu0 %v1790
    %1948 = vmatpush.bf16.msra.mxu0 %v1789
    %1949 = vmatpush.bf16.msra.mxu0 %v1788
    %1950 = vmatpush.bf16.msra.mxu0 %v1787
    %1951 = vmatpush.bf16.msra.mxu0 %v1786
    %1952 = vmatpush.bf16.msra.mxu0 %v1785
    %1953 = vmatpush.bf16.msra.mxu0 %v1784
    %1954 = vmatpush.bf16.msra.mxu0 %v1783
    %1955 = vmatmul.bf16.gmra.mxu0 %v1314
    %v1956 = vpop.f32.mrf.mxu0
    %v1957 = vadd.f32 %v1944, %v1956
    %v1958 = vpop.f32.mrf.mxu0
    %1959 = vdwg.mxu0
    %1960 = vmatpush.bf16.msra.mxu0 %v1798
    %1961 = vmatpush.bf16.msra.mxu0 %v1797
    %1962 = vmatpush.bf16.msra.mxu0 %v1796
    %1963 = vmatpush.bf16.msra.mxu0 %v1795
    %1964 = vmatpush.bf16.msra.mxu0 %v1794
    %1965 = vmatpush.bf16.msra.mxu0 %v1793
    %1966 = vmatpush.bf16.msra.mxu0 %v1792
    %1967 = vmatpush.bf16.msra.mxu0 %v1791
    %1968 = vmatmul.bf16.gmra.mxu0 %v1315
    %v1969 = vpop.f32.mrf.mxu0
    %v1970 = vadd.f32 %v1957, %v1969
    %v1971 = vpop.f32.mrf.mxu0
    %1972 = vdwg.mxu0
    %1973 = vmatpush.bf16.msra.mxu0 %v1806
    %1974 = vmatpush.bf16.msra.mxu0 %v1805
    %1975 = vmatpush.bf16.msra.mxu0 %v1804
    %1976 = vmatpush.bf16.msra.mxu0 %v1803
    %1977 = vmatpush.bf16.msra.mxu0 %v1802
    %1978 = vmatpush.bf16.msra.mxu0 %v1801
    %1979 = vmatpush.bf16.msra.mxu0 %v1800
    %1980 = vmatpush.bf16.msra.mxu0 %v1799
    %1981 = vmatmul.bf16.gmra.mxu0 %v1316
    %v1982 = vpop.f32.mrf.mxu0
    %v1983 = vadd.f32 %v1970, %v1982
    %v1984 = vpop.f32.mrf.mxu0
    %1985 = vdwg.mxu0
    %1986 = vmatpush.bf16.msra.mxu0 %v1814
    %1987 = vmatpush.bf16.msra.mxu0 %v1813
    %1988 = vmatpush.bf16.msra.mxu0 %v1812
    %1989 = vmatpush.bf16.msra.mxu0 %v1811
    %1990 = vmatpush.bf16.msra.mxu0 %v1810
    %1991 = vmatpush.bf16.msra.mxu0 %v1809
    %1992 = vmatpush.bf16.msra.mxu0 %v1808
    %1993 = vmatpush.bf16.msra.mxu0 %v1807
    %1994 = vmatmul.bf16.gmra.mxu0 %v1317
    %v1995 = vpop.f32.mrf.mxu0
    %v1996 = vadd.f32 %v1983, %v1995
    %v1997 = vpop.f32.mrf.mxu0
    %1998 = vdwg.mxu0
    %1999 = vmatpush.bf16.msra.mxu0 %v1822
    %2000 = vmatpush.bf16.msra.mxu0 %v1821
    %2001 = vmatpush.bf16.msra.mxu0 %v1820
    %2002 = vmatpush.bf16.msra.mxu0 %v1819
    %2003 = vmatpush.bf16.msra.mxu0 %v1818
    %2004 = vmatpush.bf16.msra.mxu0 %v1817
    %2005 = vmatpush.bf16.msra.mxu0 %v1816
    %2006 = vmatpush.bf16.msra.mxu0 %v1815
    %2007 = vmatmul.bf16.gmra.mxu0 %v1318
    %v2008 = vpop.f32.mrf.mxu0
    %v2009 = vadd.f32 %v1996, %v2008
    %v2010 = vpop.f32.mrf.mxu0
    %2011 = vdwg.mxu0
    %v2017 = vunpack.c.l.b16 %v1244
    %v2018 = vunpack.c.h.b16 %v1244
    %v2019 = vunpack.c.l.b16 %v1245
    %v2020 = vunpack.c.h.b16 %v1245
    %v2021 = vunpack.c.l.b16 %v1246
    %v2022 = vunpack.c.h.b16 %v1246
    %v2023 = vunpack.c.l.b16 %v1247
    %v2024 = vunpack.c.h.b16 %v1247
    %v2025 = vunpack.c.l.b16 %v1248
    %v2026 = vpack.c.b16 %v2017, %v2017
    %v2027 = vpack.c.b16 %v2018, %v2018
    %v2028 = vpack.c.b16 %v2019, %v2019
    %v2029 = vpack.c.b16 %v2020, %v2020
    %v2030 = vpack.c.b16 %v2021, %v2021
    %v2031 = vpack.c.b16 %v2022, %v2022
    %v2032 = vpack.c.b16 %v2023, %v2023
    %v2033 = vpack.c.b16 %v2024, %v2024
    %v2034 = vpack.c.b16 %v2025, %v2025
    %2044 = vmatpush.bf16.msra.mxu0 %v1758
    %2045 = vmatpush.bf16.msra.mxu0 %v1757
    %2046 = vmatpush.bf16.msra.mxu0 %v1756
    %2047 = vmatpush.bf16.msra.mxu0 %v1755
    %2048 = vmatpush.bf16.msra.mxu0 %v1754
    %2049 = vmatpush.bf16.msra.mxu0 %v1753
    %2050 = vmatpush.bf16.msra.mxu0 %v1752
    %2051 = vmatpush.bf16.msra.mxu0 %v1751
    %2052 = vmatmul.bf16.gmra.mxu0 %v2026
    %v2053 = vpop.f32.mrf.mxu0
    %v2054 = vadd.f32 %v2009, %v2053
    %v2055 = vpop.f32.mrf.mxu0
    %2056 = vdwg.mxu0
    %2057 = vmatpush.bf16.msra.mxu0 %v1766
    %2058 = vmatpush.bf16.msra.mxu0 %v1765
    %2059 = vmatpush.bf16.msra.mxu0 %v1764
    %2060 = vmatpush.bf16.msra.mxu0 %v1763
    %2061 = vmatpush.bf16.msra.mxu0 %v1762
    %2062 = vmatpush.bf16.msra.mxu0 %v1761
    %2063 = vmatpush.bf16.msra.mxu0 %v1760
    %2064 = vmatpush.bf16.msra.mxu0 %v1759
    %2065 = vmatmul.bf16.gmra.mxu0 %v2027
    %v2066 = vpop.f32.mrf.mxu0
    %v2067 = vadd.f32 %v2054, %v2066
    %v2068 = vpop.f32.mrf.mxu0
    %2069 = vdwg.mxu0
    %2070 = vmatpush.bf16.msra.mxu0 %v1774
    %2071 = vmatpush.bf16.msra.mxu0 %v1773
    %2072 = vmatpush.bf16.msra.mxu0 %v1772
    %2073 = vmatpush.bf16.msra.mxu0 %v1771
    %2074 = vmatpush.bf16.msra.mxu0 %v1770
    %2075 = vmatpush.bf16.msra.mxu0 %v1769
    %2076 = vmatpush.bf16.msra.mxu0 %v1768
    %2077 = vmatpush.bf16.msra.mxu0 %v1767
    %2078 = vmatmul.bf16.gmra.mxu0 %v2028
    %v2079 = vpop.f32.mrf.mxu0
    %v2080 = vadd.f32 %v2067, %v2079
    %v2081 = vpop.f32.mrf.mxu0
    %2082 = vdwg.mxu0
    %2083 = vmatpush.bf16.msra.mxu0 %v1782
    %2084 = vmatpush.bf16.msra.mxu0 %v1781
    %2085 = vmatpush.bf16.msra.mxu0 %v1780
    %2086 = vmatpush.bf16.msra.mxu0 %v1779
    %2087 = vmatpush.bf16.msra.mxu0 %v1778
    %2088 = vmatpush.bf16.msra.mxu0 %v1777
    %2089 = vmatpush.bf16.msra.mxu0 %v1776
    %2090 = vmatpush.bf16.msra.mxu0 %v1775
    %2091 = vmatmul.bf16.gmra.mxu0 %v2029
    %v2092 = vpop.f32.mrf.mxu0
    %v2093 = vadd.f32 %v2080, %v2092
    %v2094 = vpop.f32.mrf.mxu0
    %2095 = vdwg.mxu0
    %2096 = vmatpush.bf16.msra.mxu0 %v1790
    %2097 = vmatpush.bf16.msra.mxu0 %v1789
    %2098 = vmatpush.bf16.msra.mxu0 %v1788
    %2099 = vmatpush.bf16.msra.mxu0 %v1787
    %2100 = vmatpush.bf16.msra.mxu0 %v1786
    %2101 = vmatpush.bf16.msra.mxu0 %v1785
    %2102 = vmatpush.bf16.msra.mxu0 %v1784
    %2103 = vmatpush.bf16.msra.mxu0 %v1783
    %2104 = vmatmul.bf16.gmra.mxu0 %v2030
    %v2105 = vpop.f32.mrf.mxu0
    %v2106 = vadd.f32 %v2093, %v2105
    %v2107 = vpop.f32.mrf.mxu0
    %2108 = vdwg.mxu0
    %2109 = vmatpush.bf16.msra.mxu0 %v1798
    %2110 = vmatpush.bf16.msra.mxu0 %v1797
    %2111 = vmatpush.bf16.msra.mxu0 %v1796
    %2112 = vmatpush.bf16.msra.mxu0 %v1795
    %2113 = vmatpush.bf16.msra.mxu0 %v1794
    %2114 = vmatpush.bf16.msra.mxu0 %v1793
    %2115 = vmatpush.bf16.msra.mxu0 %v1792
    %2116 = vmatpush.bf16.msra.mxu0 %v1791
    %2117 = vmatmul.bf16.gmra.mxu0 %v2031
    %v2118 = vpop.f32.mrf.mxu0
    %v2119 = vadd.f32 %v2106, %v2118
    %v2120 = vpop.f32.mrf.mxu0
    %2121 = vdwg.mxu0
    %2122 = vmatpush.bf16.msra.mxu0 %v1806
    %2123 = vmatpush.bf16.msra.mxu0 %v1805
    %2124 = vmatpush.bf16.msra.mxu0 %v1804
    %2125 = vmatpush.bf16.msra.mxu0 %v1803
    %2126 = vmatpush.bf16.msra.mxu0 %v1802
    %2127 = vmatpush.bf16.msra.mxu0 %v1801
    %2128 = vmatpush.bf16.msra.mxu0 %v1800
    %2129 = vmatpush.bf16.msra.mxu0 %v1799
    %2130 = vmatmul.bf16.gmra.mxu0 %v2032
    %v2131 = vpop.f32.mrf.mxu0
    %v2132 = vadd.f32 %v2119, %v2131
    %v2133 = vpop.f32.mrf.mxu0
    %2134 = vdwg.mxu0
    %2135 = vmatpush.bf16.msra.mxu0 %v1814
    %2136 = vmatpush.bf16.msra.mxu0 %v1813
    %2137 = vmatpush.bf16.msra.mxu0 %v1812
    %2138 = vmatpush.bf16.msra.mxu0 %v1811
    %2139 = vmatpush.bf16.msra.mxu0 %v1810
    %2140 = vmatpush.bf16.msra.mxu0 %v1809
    %2141 = vmatpush.bf16.msra.mxu0 %v1808
    %2142 = vmatpush.bf16.msra.mxu0 %v1807
    %2143 = vmatmul.bf16.gmra.mxu0 %v2033
    %v2144 = vpop.f32.mrf.mxu0
    %v2145 = vadd.f32 %v2132, %v2144
    %v2146 = vpop.f32.mrf.mxu0
    %2147 = vdwg.mxu0
    %2148 = vmatpush.bf16.msra.mxu0 %v1822
    %2149 = vmatpush.bf16.msra.mxu0 %v1821
    %2150 = vmatpush.bf16.msra.mxu0 %v1820
    %2151 = vmatpush.bf16.msra.mxu0 %v1819
    %2152 = vmatpush.bf16.msra.mxu0 %v1818
    %2153 = vmatpush.bf16.msra.mxu0 %v1817
    %2154 = vmatpush.bf16.msra.mxu0 %v1816
    %2155 = vmatpush.bf16.msra.mxu0 %v1815
    %2156 = vmatmul.bf16.gmra.mxu0 %v2034
    %v2157 = vpop.f32.mrf.mxu0
    %v2158 = vadd.f32 %v2145, %v2157
    %v2159 = vpop.f32.mrf.mxu0
    %2160 = vdwg.mxu0
    %v2161 = vsub.f32 %v2158, 1.0
    %v2162 = vmul.f32 %v2161, 0.5
    %v2163 = vmax.f32 %v2162, -0.999999
    %v2164 = vmin.f32 %v2163, 0.999999
    %v2165 = vand.u32 2147483647, %v2164
    %v2166 = vmul.f32 %v2165, -0.0012624911
    %v2167 = vadd.f32 %v2166, 0.00667009
    %v2168 = vmul.f32 %v2167, %v2165
    %v2169 = vadd.f32 %v2168, -0.017088126
    %v2170 = vmul.f32 %v2169, %v2165
    %v2171 = vadd.f32 %v2170, 0.03089188
    %v2172 = vmul.f32 %v2171, %v2165
    %v2173 = vadd.f32 %v2172, -0.050174303
    %v2174 = vmul.f32 %v2173, %v2165
    %v2175 = vadd.f32 %v2174, 0.08897899
    %v2176 = vmul.f32 %v2175, %v2165
    %v2177 = vadd.f32 %v2176, -0.2145988
    %v2178 = vmul.f32 %v2177, %v2165
    %v2179 = vadd.f32 %v2178, 1.5707963
    %v2180 = vsub.f32 1.0, %v2165
    %v2181 = vmax.f32 %v2180, 0.0
    %v2182 = vrsqrt.pop %v2181
    %v2183 = vmul.f32 %v2182, %v2181
    %v2184 = vmul.f32 %v2183, %v2182
    %v2185 = vmul.f32 0.5, %v2184
    %v2186 = vsub.f32 1.5, %v2185
    %v2187 = vmul.f32 %v2182, %v2186
    %v2188 = vmul.f32 %v2181, %v2187
    %vm2189 = vcmp.eq.f32.partialorder %v2181, inf
    %v2190 = vsel %vm2189, %v2181, %v2188
    %vm2191 = vcmp.eq.f32.partialorder %v2181, 0.0
    %v2192 = vand.u32 %v2181, 2147483648
    %v2193 = vsel %vm2191, %v2192, %v2190
    %v2194 = vmul.f32 %v2179, %v2193
    %vm2195 = vcmp.lt.f32.partialorder %v2164, 0.0
    %v2196 = vsub.f32 3.1415927, %v2194
    %v2197 = vsel %vm2195, %v2196, %v2194
    %s2198 = sadd.s32 %s56, 1
    %s2199 = smul.u32 %s2198, 128
    %p2200 = scmp.le.s32.totalorder %s2199, 16
    // Predicated region
    $region22: #{tpu_custom_call.1} parent=1 // pred_check
      %p2201 = pneg %p2200
    $region23: #{tpu_custom_call.1} parent=1 // pred_check_branch
      %2203 = sbr.rel (%p2201) target = $region25
    $region24: #{tpu_custom_call.1} parent=1 // pred_region
      %v2204 = vld [vmem:[#allocation3] sm:$0x1]
      %v2205 = vadd.f32 %v2204, %v2197
      %2206 = vst [vmem:[#allocation3] sm:$0x1] %v2205
    $region25: #{tpu_custom_call.1} parent=1 // pred_fallthru
      _
    %p2207 = scmp.gt.s32.totalorder %s2199, 16
    // Predicated region
    $region26: #{tpu_custom_call.1} parent=1 // pred_check
      %p2208 = pneg %p2207
    $region27: #{tpu_custom_call.1} parent=1 // pred_check_branch
      %2210 = sbr.rel (%p2208) target = $region29
    $region28: #{tpu_custom_call.1} parent=1 // pred_region
      %v2211 = vlaneseq
      %v2212 = vshrl.u32 %v2211, 7
      %v2213 = vlaneseq
      %v2214 = vand.u32 %v2213, 127
      %v2215 = vstv %s56
      %v2216 = vadd.s32 %v2215, %v2212
      %v2217 = vmul.u32 %v2216, 128
      %v2218 = vadd.s32 %v2217, %v2214
      %v2219 = vld [vmem:[#allocation3] sm:$0x1]
      %vm2220 = vcmp.lt.s32.totalorder %v2218, 16
      %v2221 = vsel %vm2220, %v2197, 0.0
      %v2222 = vadd.f32 %v2219, %v2221
      %2223 = vst [vmem:[#allocation3] sm:$0x1] %v2222
    $region29: #{tpu_custom_call.1} parent=1 // pred_fallthru
      _
    // Predicated region
    $region30: #{tpu_custom_call.1} parent=1 // pred_check
      %p2224 = pneg %p57
    $region31: #{tpu_custom_call.1} parent=1 // pred_check_branch
      %2226 = sbr.rel (%p2224) target = $region33
    $region32: #{tpu_custom_call.1} parent=1 // pred_region
      %v2227 = vld [vmem:[#allocation3] sm:$0x1]
      %v2228 = vsel %vm1273, %v2227, 0.0
      %2229 = vadd.xlane.f32.xlu0 %v2228
      %v2230 = vpop.xlane.xlu0 %2229
      %v2231 = vrot.slane %v2230, 4
      %v2232 = vadd.f32 %v2230, %v2231
      %v2233 = vrot.slane %v2232, 2
      %v2234 = vadd.f32 %v2232, %v2233
      %v2235 = vrot.slane %v2234, 1
      %v2236 = vadd.f32 %v2234, %v2235
      %s2237 = vtos %v2236
      %v2238 = vlaneseq
      %v2239 = vshrl.u32 %v2238, 7
      %v2240 = vlaneseq
      %v2241 = vand.u32 %v2240, 127
      %vm2242 = vcmp.eq.s32.totalorder %v2239, 0
      %vm2243 = vcmp.eq.s32.totalorder %v2241, 0
      %vm2244 = vmand %vm2242, %vm2243
      %v2245 = vstv %s2237
      %v2246 = vsel %vm2244, %v2245, 0.0
      %2247 = vst [vmem:[#allocation9] sm:$0xff] %v2246
    $region33: #{tpu_custom_call.1} parent=1 // pred_fallthru
      _
    // Predicated region
    $region34: #{tpu_custom_call.1} parent=1 // pred_check
      _
    $region35: #{tpu_custom_call.1} parent=1 // pred_check_branch
      %2249 = sbr.rel (0) target = $region37
    $region36: #{tpu_custom_call.1} parent=1 // pred_region
      %2251 = vsyncadd [#allocation6], 0
      %s2253 = sshll.u32 [#allocation9], 4
      %s2254 = int_to_ptr.vmem [resolvable:$true] %s2253
      %s2255 = sshll.u32 %s2, 4
      %s2256 = int_to_ptr.hbm [resolvable:$true] %s2255
      %2258 = dma.vmem_to_hbm [thread:$0]  %s2254, 128, %s2256, [#allocation6]
    $region37: #{tpu_custom_call.1} parent=1 // pred_fallthru
      _
    // Predicated region
    $region38: #{tpu_custom_call.1} parent=1 // pred_check
      _
    $region39: #{tpu_custom_call.1} parent=1 // pred_check_branch
      %2260 = sbr.rel (0) target = $region41
    $region40: #{tpu_custom_call.1} parent=1 // pred_region
      %2262 = dma.done [#allocation6], 128
    $region41: #{tpu_custom_call.1} parent=1 // pred_fallthru
      _
    %2263 = vsyncpa [#allocation5], 1
    %2264 = vsyncpa [#allocation8], 1
    %2265 = vsyncpa [#allocation6], 1

</llo_original>
